<compile_context>
chip_gen: v7x
topology: tpu7x:2x2x1
jax: 0.10.0
libtpu: 0.0.40
codegen_flags: <defaults>
</compile_context>

<pallas_src>
import math

import jax
import jax.numpy as jnp
from jax.experimental import pallas as pl
from jax.experimental.pallas import tpu as pltpu  # noqa: F401  (kept for parity / future tuning)

# ----------------------------- config (small) -------------------------------
BATCH = 2
SEQ = 8
HIDDEN = 32
NUM_HEADS = 4
HEAD_DIM = HIDDEN // NUM_HEADS
INTERMEDIATE = 64            # == 2 * HIDDEN
LN_EPS = 1e-5

# ------------------------ packed bias/LN slab layout -------------------------
_R_LN1_G, _R_LN1_B = 0, 1
_R_LN2_G, _R_LN2_B = 2, 3
_R_LN3_G, _R_LN3_B = 4, 5
_R_BQKVO = 6                 # lanes [0:96] = bq*scale | bk | bv ; lanes [96:128] = bo
_R_BUP = 7                   # lanes [0:64] = fb1 ; lanes [64:128] = ffb1
_R_BDN = 8                   # lanes [0:32] = fb2 ; lanes [32:64]  = ffb2
_BIAS_ROWS, _BIAS_LANES = 16, 128


# ------------------------------ kernel helpers ------------------------------
def _layer_norm(h, gamma, beta):
    mu = jnp.mean(h, axis=-1, keepdims=True)
    var = jnp.mean((h - mu) ** 2, axis=-1, keepdims=True)
    return (h - mu) * jax.lax.rsqrt(var + LN_EPS) * gamma + beta


def _silu(h):
    return h * jax.nn.sigmoid(h)


# ------------------------------ Pallas kernel -------------------------------
def sundial_block_kernel(xf_ref, temb_ref, bias_ref, wqkvo_ref, wup_ref, wdn_ref, out_ref):
    H, D, NH, I = HIDDEN, HEAD_DIM, NUM_HEADS, INTERMEDIATE
    BS = xf_ref.shape[0]
    B = temb_ref.shape[0]
    S = BS // B
    f32 = jnp.float32

    # ---- parameters (loaded once; all slices static) ----
    bias = bias_ref[...]                                               # (16, 128)
    ln1_g, ln1_b = bias[_R_LN1_G:_R_LN1_G + 1, :H], bias[_R_LN1_B:_R_LN1_B + 1, :H]
    ln2_g, ln2_b = bias[_R_LN2_G:_R_LN2_G + 1, :H], bias[_R_LN2_B:_R_LN2_B + 1, :H]
    ln3_g, ln3_b = bias[_R_LN3_G:_R_LN3_G + 1, :H], bias[_R_LN3_B:_R_LN3_B + 1, :H]
    b_qkv = bias[_R_BQKVO:_R_BQKVO + 1, :3 * H]                        # (1, 96)
    bo = bias[_R_BQKVO:_R_BQKVO + 1, 3 * H:4 * H]                      # (1, 32)
    fb1 = bias[_R_BUP:_R_BUP + 1, :2 * H]                              # (1, 64)
    ffb1 = bias[_R_BUP:_R_BUP + 1, 2 * H:2 * H + I]                    # (1, 64)
    fb2 = bias[_R_BDN:_R_BDN + 1, :H]                                  # (1, 32)
    ffb2 = bias[_R_BDN:_R_BDN + 1, H:2 * H]                            # (1, 32)

    w_qkv = wqkvo_ref[:, :3 * H]                                       # (32, 96), wq pre-scaled
    w_o = wqkvo_ref[:, 3 * H:4 * H]                                    # (32, 32)
    fw1 = wup_ref[:, :2 * H]                                           # (32, 64)
    ffw1 = wup_ref[:, 2 * H:2 * H + I]                                 # (32, 64)
    fw2 = wdn_ref[:2 * H, :]                                           # (64, 32)
    ffw2 = wdn_ref[2 * H:2 * H + I, :]                                 # (64, 32)

    x = xf_ref[...]                                                    # (B*S, H) = (16, 32)

    # ---------------- attention branch: x = x + Attn(LN1(x)) ----------------
    h1 = _layer_norm(x, ln1_g, ln1_b)
    qkv = jnp.dot(h1, w_qkv, preferred_element_type=f32) + b_qkv       # (16, 96): ONE MXU push

    ctx_rows = []
    for b in range(B):                                                 # static, B=2
        r = b * S
        q_b = qkv[r:r + S, 0:H]                                        # (8, 32)
        k_b = qkv[r:r + S, H:2 * H]
        v_b = qkv[r:r + S, 2 * H:3 * H]
        head_ctx = []
        for h in range(NH):                                            # static, NH=4
            c = h * D
            q_h = q_b[:, c:c + D]                                      # (8, 8)
            k_h = k_b[:, c:c + D]
            v_h = v_b[:, c:c + D]
            s = jnp.einsum("qd,kd->qk", q_h, k_h,
                           preferred_element_type=f32)                 # (8, 8), scale pre-folded
            s = s - jnp.max(s, axis=-1, keepdims=True)
            p = jnp.exp(s)
            p = p * pl.reciprocal(jnp.sum(p, axis=-1, keepdims=True), approx=True)
            head_ctx.append(jnp.dot(p, v_h, preferred_element_type=f32))
        ctx_rows.append(jnp.concatenate(head_ctx, axis=-1))            # (8, 32) lane concat
    ctx = jnp.concatenate(ctx_rows, axis=0)                            # (16, 32) sublane concat

    x = x + jnp.dot(ctx, w_o, preferred_element_type=f32) + bo         # ONE O-projection matmul

    # ---------------- timestep embedding (broadcast over seq) ---------------
    temb_full = jnp.concatenate(
        [jnp.broadcast_to(temb_ref[b:b + 1, :], (S, H)) for b in range(B)], axis=0)
    x = x + temb_full

    # -------- flow branch: FlowLayer(LN2(x)) = LN2(x) + flow_net(LN2(x)) ----
    h2 = _layer_norm(x, ln2_g, ln2_b)
    t = _silu(jnp.dot(h2, fw1, preferred_element_type=f32) + fb1)
    x = x + h2 + jnp.dot(t, fw2, preferred_element_type=f32) + fb2

    # ---------------- feed-forward: x = x + FFN(LN3(x)) ---------------------
    h3 = _layer_norm(x, ln3_g, ln3_b)
    f = _silu(jnp.dot(h3, ffw1, preferred_element_type=f32) + ffb1)
    x = x + jnp.dot(f, ffw2, preferred_element_type=f32) + ffb2

    out_ref[...] = x.astype(out_ref.dtype)


# ------------------------------ param packing --------------------------------
def pack_params(p):
    H, D = HIDDEN, HEAD_DIM
    scale = 1.0 / math.sqrt(D)

    # Softmax scale folded into Q weights/bias at pack time.
    w_qkvo = jnp.concatenate([p["wq"] * scale, p["wk"], p["wv"], p["wo"]], axis=1)  # (32, 128)
    w_up = jnp.concatenate([p["fw1"], p["ffw1"]], axis=1)                            # (32, 128)
    w_dn = jnp.concatenate([p["fw2"], p["ffw2"]], axis=0)                            # (128, 32)

    bias = jnp.zeros((_BIAS_ROWS, _BIAS_LANES), jnp.float32)

    def put(buf, row, col, vec):
        return buf.at[row, col:col + vec.shape[0]].set(vec)

    bias = put(bias, _R_LN1_G, 0, p["ln1_g"]); bias = put(bias, _R_LN1_B, 0, p["ln1_b"])
    bias = put(bias, _R_LN2_G, 0, p["ln2_g"]); bias = put(bias, _R_LN2_B, 0, p["ln2_b"])
    bias = put(bias, _R_LN3_G, 0, p["ln3_g"]); bias = put(bias, _R_LN3_B, 0, p["ln3_b"])
    bias = put(bias, _R_BQKVO, 0, p["bq"] * scale)
    bias = put(bias, _R_BQKVO, H, p["bk"])
    bias = put(bias, _R_BQKVO, 2 * H, p["bv"])
    bias = put(bias, _R_BQKVO, 3 * H, p["bo"])
    bias = put(bias, _R_BUP, 0, p["fb1"])
    bias = put(bias, _R_BUP, 2 * H, p["ffb1"])
    bias = put(bias, _R_BDN, 0, p["fb2"])
    bias = put(bias, _R_BDN, H, p["ffb2"])
    return bias, w_qkvo, w_up, w_dn


# ------------------------------ wrapper ---------------------------------------
def sundial_block(x, temb, packed):
    # Single invocation on one TensorCore: whole problem (< 0.5 MiB incl. double-buffering)
    # fits VMEM on v5e/v6e/v7x; no grid, no megacore split (pure overhead at this size).
    bias, w_qkvo, w_up, w_dn = packed
    B, S, H = x.shape
    xf = x.reshape(B * S, H)                     # batch flattened into sublanes
    out = pl.pallas_call(
        sundial_block_kernel,
        out_shape=jax.ShapeDtypeStruct((B * S, H), jnp.float32),
    )(xf, temb, bias, w_qkvo, w_up, w_dn)
    return out.reshape(B, S, H)


# --------------------------- pure-JAX reference ------------------------------
def sundial_block_ref(x, temb, p):
    def ln(h, g, b):
        mu = jnp.mean(h, axis=-1, keepdims=True)
        var = jnp.mean((h - mu) ** 2, axis=-1, keepdims=True)
        return (h - mu) / jnp.sqrt(var + LN_EPS) * g + b

    B, S, H = x.shape
    h = ln(x, p["ln1_g"], p["ln1_b"])
    q = (h @ p["wq"] + p["bq"]).reshape(B, S, NUM_HEADS, HEAD_DIM)
    k = (h @ p["wk"] + p["bk"]).reshape(B, S, NUM_HEADS, HEAD_DIM)
    v = (h @ p["wv"] + p["bv"]).reshape(B, S, NUM_HEADS, HEAD_DIM)
    s = jnp.einsum("bqhd,bkhd->bhqk", q, k) / math.sqrt(HEAD_DIM)
    pr = jax.nn.softmax(s, axis=-1)
    ctx = jnp.einsum("bhqk,bkhd->bqhd", pr, v).reshape(B, S, H)
    x = x + ctx @ p["wo"] + p["bo"]
    x = x + temb[:, None, :]
    h2 = ln(x, p["ln2_g"], p["ln2_b"])
    x = x + h2 + jax.nn.silu(h2 @ p["fw1"] + p["fb1"]) @ p["fw2"] + p["fb2"]
    h3 = ln(x, p["ln3_g"], p["ln3_b"])
    x = x + jax.nn.silu(h3 @ p["ffw1"] + p["ffb1"]) @ p["ffw2"] + p["ffb2"]
    return x


# ------------------------------ param init -----------------------------------
def init_params(key):
    keys = jax.random.split(key, 20)
    scale = 0.05

    def w(k, shape):
        return (scale * jax.random.normal(k, shape)).astype(jnp.float32)

    H, I = HIDDEN, INTERMEDIATE
    return {
        "ln1_g": jnp.ones((H,), jnp.float32), "ln1_b": jnp.zeros((H,), jnp.float32),
        "wq": w(keys[0], (H, H)), "bq": w(keys[12], (H,)),
        "wk": w(keys[1], (H, H)), "bk": w(keys[13], (H,)),
        "wv": w(keys[2], (H, H)), "bv": w(keys[14], (H,)),
        "wo": w(keys[3], (H, H)), "bo": w(keys[15], (H,)),
        "ln2_g": jnp.ones((H,), jnp.float32), "ln2_b": jnp.zeros((H,), jnp.float32),
        "fw1": w(keys[4], (H, 2 * H)), "fb1": w(keys[5], (2 * H,)),
        "fw2": w(keys[6], (2 * H, H)), "fb2": w(keys[7], (H,)),
        "ln3_g": jnp.ones((H,), jnp.float32), "ln3_b": jnp.zeros((H,), jnp.float32),
        "ffw1": w(keys[8], (H, I)), "ffb1": w(keys[9], (I,)),
        "ffw2": w(keys[10], (I, H)), "ffb2": w(keys[11], (H,)),
    }


# ---------------------------------- main --------------------------------------
if __name__ == "__main__":
    key = jax.random.PRNGKey(0)
    kx, kt, kp = jax.random.split(key, 3)

    x = jax.random.normal(kx, (BATCH, SEQ, HIDDEN), dtype=jnp.float32)
    temb = jax.random.normal(kt, (BATCH, HIDDEN), dtype=jnp.float32)
    params = init_params(kp)
    packed = pack_params(params)

    out = sundial_block(x, temb, packed)
    out = jax.block_until_ready(out)

    ref = sundial_block_ref(x, temb, params)
    assert out.shape == (BATCH, SEQ, HIDDEN)
    assert jnp.max(jnp.abs(out - ref)) < 3e-3, "mismatch vs JAX reference"

    print("KERNEL_OK")
</pallas_src>

<mosaic_0001>
module attributes {stable_mosaic.version = 11 : i64} {
  func.func @sundial_block_kernel(%arg0: memref<16x32xf32, #tpu.memory_space<vmem>>, %arg1: memref<2x32xf32, #tpu.memory_space<vmem>>, %arg2: memref<16x128xf32, #tpu.memory_space<vmem>>, %arg3: memref<32x128xf32, #tpu.memory_space<vmem>>, %arg4: memref<32x128xf32, #tpu.memory_space<vmem>>, %arg5: memref<128x32xf32, #tpu.memory_space<vmem>>, %arg6: memref<16x32xf32, #tpu.memory_space<vmem>>) attributes {dimension_semantics = [], scalar_prefetch = 0 : i64, scratch_operands = 0 : i64, tpu.core_type = #tpu.core_type<tc>} {
    %c0 = arith.constant 0 : index
    %c0_0 = arith.constant 0 : index
    %0 = vector.load %arg2[%c0, %c0_0] : memref<16x128xf32, #tpu.memory_space<vmem>>, vector<16x128xf32>
    %1 = vector.extract_strided_slice %0 {offsets = [0, 0], sizes = [1, 32], strides = [1, 1]} : vector<16x128xf32> to vector<1x32xf32>
    %2 = vector.extract_strided_slice %0 {offsets = [1, 0], sizes = [1, 32], strides = [1, 1]} : vector<16x128xf32> to vector<1x32xf32>
    %3 = vector.extract_strided_slice %0 {offsets = [2, 0], sizes = [1, 32], strides = [1, 1]} : vector<16x128xf32> to vector<1x32xf32>
    %4 = vector.extract_strided_slice %0 {offsets = [3, 0], sizes = [1, 32], strides = [1, 1]} : vector<16x128xf32> to vector<1x32xf32>
    %5 = vector.extract_strided_slice %0 {offsets = [4, 0], sizes = [1, 32], strides = [1, 1]} : vector<16x128xf32> to vector<1x32xf32>
    %6 = vector.extract_strided_slice %0 {offsets = [5, 0], sizes = [1, 32], strides = [1, 1]} : vector<16x128xf32> to vector<1x32xf32>
    %7 = vector.extract_strided_slice %0 {offsets = [6, 0], sizes = [1, 96], strides = [1, 1]} : vector<16x128xf32> to vector<1x96xf32>
    %8 = vector.extract_strided_slice %0 {offsets = [6, 96], sizes = [1, 32], strides = [1, 1]} : vector<16x128xf32> to vector<1x32xf32>
    %9 = vector.extract_strided_slice %0 {offsets = [7, 0], sizes = [1, 64], strides = [1, 1]} : vector<16x128xf32> to vector<1x64xf32>
    %10 = vector.extract_strided_slice %0 {offsets = [7, 64], sizes = [1, 64], strides = [1, 1]} : vector<16x128xf32> to vector<1x64xf32>
    %11 = vector.extract_strided_slice %0 {offsets = [8, 0], sizes = [1, 32], strides = [1, 1]} : vector<16x128xf32> to vector<1x32xf32>
    %12 = vector.extract_strided_slice %0 {offsets = [8, 32], sizes = [1, 32], strides = [1, 1]} : vector<16x128xf32> to vector<1x32xf32>
    %c0_1 = arith.constant 0 : index
    %c0_2 = arith.constant 0 : index
    %13 = vector.load %arg3[%c0_1, %c0_2] : memref<32x128xf32, #tpu.memory_space<vmem>>, vector<32x96xf32>
    %c0_3 = arith.constant 0 : index
    %c96 = arith.constant 96 : index
    %14 = vector.load %arg3[%c0_3, %c96] : memref<32x128xf32, #tpu.memory_space<vmem>>, vector<32x32xf32>
    %c0_4 = arith.constant 0 : index
    %c0_5 = arith.constant 0 : index
    %15 = vector.load %arg4[%c0_4, %c0_5] : memref<32x128xf32, #tpu.memory_space<vmem>>, vector<32x64xf32>
    %c0_6 = arith.constant 0 : index
    %c64 = arith.constant 64 : index
    %16 = vector.load %arg4[%c0_6, %c64] : memref<32x128xf32, #tpu.memory_space<vmem>>, vector<32x64xf32>
    %c0_7 = arith.constant 0 : index
    %c0_8 = arith.constant 0 : index
    %17 = vector.load %arg5[%c0_7, %c0_8] : memref<128x32xf32, #tpu.memory_space<vmem>>, vector<64x32xf32>
    %c64_9 = arith.constant 64 : index
    %c0_10 = arith.constant 0 : index
    %18 = vector.load %arg5[%c64_9, %c0_10] : memref<128x32xf32, #tpu.memory_space<vmem>>, vector<64x32xf32>
    %c0_11 = arith.constant 0 : index
    %c0_12 = arith.constant 0 : index
    %19 = vector.load %arg0[%c0_11, %c0_12] : memref<16x32xf32, #tpu.memory_space<vmem>>, vector<16x32xf32>
    %cst = arith.constant dense<0.000000e+00> : vector<16xf32>
    %20 = vector.multi_reduction <add>, %19, %cst [1] : vector<16x32xf32> to vector<16xf32>
    %21 = vector.shape_cast %20 : vector<16xf32> to vector<16x1xf32>
    %cst_13 = arith.constant 3.200000e+01 : f32
    %22 = vector.broadcast %cst_13 : f32 to vector<16x1xf32>
    %23 = arith.divf %21, %22 : vector<16x1xf32>
    %24 = vector.broadcast %23 : vector<16x1xf32> to vector<16x32xf32>
    %25 = arith.subf %19, %24 : vector<16x32xf32>
    %26 = arith.mulf %25, %25 : vector<16x32xf32>
    %cst_14 = arith.constant dense<0.000000e+00> : vector<16xf32>
    %27 = vector.multi_reduction <add>, %26, %cst_14 [1] : vector<16x32xf32> to vector<16xf32>
    %28 = vector.shape_cast %27 : vector<16xf32> to vector<16x1xf32>
    %cst_15 = arith.constant 3.200000e+01 : f32
    %29 = vector.broadcast %cst_15 : f32 to vector<16x1xf32>
    %30 = arith.divf %28, %29 : vector<16x1xf32>
    %31 = vector.broadcast %23 : vector<16x1xf32> to vector<16x32xf32>
    %32 = arith.subf %19, %31 : vector<16x32xf32>
    %cst_16 = arith.constant 9.99999974E-6 : f32
    %33 = vector.broadcast %cst_16 : f32 to vector<16x1xf32>
    %34 = arith.addf %30, %33 : vector<16x1xf32>
    %35 = math.rsqrt %34 : vector<16x1xf32>
    %36 = vector.broadcast %35 : vector<16x1xf32> to vector<16x32xf32>
    %37 = arith.mulf %32, %36 : vector<16x32xf32>
    %38 = vector.broadcast %1 : vector<1x32xf32> to vector<16x32xf32>
    %39 = arith.mulf %37, %38 : vector<16x32xf32>
    %40 = vector.broadcast %2 : vector<1x32xf32> to vector<16x32xf32>
    %41 = arith.addf %39, %40 : vector<16x32xf32>
    %cst_17 = arith.constant dense<0.000000e+00> : vector<16x96xf32>
    %42 = tpu.matmul %41, %13, %cst_17 {dimension_numbers = #tpu.dot_dimension_numbers<[1], [0], [0], [1], [0, 0, 1, 1], [], []>} : vector<16x32xf32>, vector<32x96xf32>, vector<16x96xf32> -> vector<16x96xf32>
    %43 = vector.broadcast %7 : vector<1x96xf32> to vector<16x96xf32>
    %44 = arith.addf %42, %43 : vector<16x96xf32>
    %45 = vector.extract_strided_slice %44 {offsets = [0, 0], sizes = [8, 32], strides = [1, 1]} : vector<16x96xf32> to vector<8x32xf32>
    %46 = vector.extract_strided_slice %44 {offsets = [0, 32], sizes = [8, 32], strides = [1, 1]} : vector<16x96xf32> to vector<8x32xf32>
    %47 = vector.extract_strided_slice %44 {offsets = [0, 64], sizes = [8, 32], strides = [1, 1]} : vector<16x96xf32> to vector<8x32xf32>
    %48 = vector.extract_strided_slice %45 {offsets = [0, 0], sizes = [8, 8], strides = [1, 1]} : vector<8x32xf32> to vector<8x8xf32>
    %49 = vector.extract_strided_slice %46 {offsets = [0, 0], sizes = [8, 8], strides = [1, 1]} : vector<8x32xf32> to vector<8x8xf32>
    %50 = vector.extract_strided_slice %47 {offsets = [0, 0], sizes = [8, 8], strides = [1, 1]} : vector<8x32xf32> to vector<8x8xf32>
    "tpu.trace_start"() <{level = 10 : i32, message = "qd,kd->qk"}> : () -> ()
    %cst_18 = arith.constant dense<0.000000e+00> : vector<8x8xf32>
    %51 = tpu.matmul %48, %49, %cst_18 {dimension_numbers = #tpu.dot_dimension_numbers<[1], [1], [0], [0], [0, 0, 1, 0], [], []>} : vector<8x8xf32>, vector<8x8xf32>, vector<8x8xf32> -> vector<8x8xf32>
    "tpu.trace_stop"() : () -> ()
    %cst_19 = arith.constant dense<0xFF800000> : vector<8xf32>
    %52 = vector.multi_reduction <maximumf>, %51, %cst_19 [1] : vector<8x8xf32> to vector<8xf32>
    %53 = vector.shape_cast %52 : vector<8xf32> to vector<8x1xf32>
    %54 = vector.broadcast %53 : vector<8x1xf32> to vector<8x8xf32>
    %55 = arith.subf %51, %54 : vector<8x8xf32>
    %56 = math.exp %55 : vector<8x8xf32>
    %cst_20 = arith.constant dense<0.000000e+00> : vector<8xf32>
    %57 = vector.multi_reduction <add>, %56, %cst_20 [1] : vector<8x8xf32> to vector<8xf32>
    %58 = vector.shape_cast %57 : vector<8xf32> to vector<8x1xf32>
    %59 = tpu.reciprocal %58 {approx = true} : vector<8x1xf32> -> vector<8x1xf32>
    %60 = vector.broadcast %59 : vector<8x1xf32> to vector<8x8xf32>
    %61 = arith.mulf %56, %60 : vector<8x8xf32>
    %cst_21 = arith.constant dense<0.000000e+00> : vector<8x8xf32>
    %62 = tpu.matmul %61, %50, %cst_21 {dimension_numbers = #tpu.dot_dimension_numbers<[1], [0], [0], [1], [0, 0, 1, 1], [], []>} : vector<8x8xf32>, vector<8x8xf32>, vector<8x8xf32> -> vector<8x8xf32>
    %63 = vector.extract_strided_slice %45 {offsets = [0, 8], sizes = [8, 8], strides = [1, 1]} : vector<8x32xf32> to vector<8x8xf32>
    %64 = vector.extract_strided_slice %46 {offsets = [0, 8], sizes = [8, 8], strides = [1, 1]} : vector<8x32xf32> to vector<8x8xf32>
    %65 = vector.extract_strided_slice %47 {offsets = [0, 8], sizes = [8, 8], strides = [1, 1]} : vector<8x32xf32> to vector<8x8xf32>
    "tpu.trace_start"() <{level = 10 : i32, message = "qd,kd->qk"}> : () -> ()
    %cst_22 = arith.constant dense<0.000000e+00> : vector<8x8xf32>
    %66 = tpu.matmul %63, %64, %cst_22 {dimension_numbers = #tpu.dot_dimension_numbers<[1], [1], [0], [0], [0, 0, 1, 0], [], []>} : vector<8x8xf32>, vector<8x8xf32>, vector<8x8xf32> -> vector<8x8xf32>
    "tpu.trace_stop"() : () -> ()
    %cst_23 = arith.constant dense<0xFF800000> : vector<8xf32>
    %67 = vector.multi_reduction <maximumf>, %66, %cst_23 [1] : vector<8x8xf32> to vector<8xf32>
    %68 = vector.shape_cast %67 : vector<8xf32> to vector<8x1xf32>
    %69 = vector.broadcast %68 : vector<8x1xf32> to vector<8x8xf32>
    %70 = arith.subf %66, %69 : vector<8x8xf32>
    %71 = math.exp %70 : vector<8x8xf32>
    %cst_24 = arith.constant dense<0.000000e+00> : vector<8xf32>
    %72 = vector.multi_reduction <add>, %71, %cst_24 [1] : vector<8x8xf32> to vector<8xf32>
    %73 = vector.shape_cast %72 : vector<8xf32> to vector<8x1xf32>
    %74 = tpu.reciprocal %73 {approx = true} : vector<8x1xf32> -> vector<8x1xf32>
    %75 = vector.broadcast %74 : vector<8x1xf32> to vector<8x8xf32>
    %76 = arith.mulf %71, %75 : vector<8x8xf32>
    %cst_25 = arith.constant dense<0.000000e+00> : vector<8x8xf32>
    %77 = tpu.matmul %76, %65, %cst_25 {dimension_numbers = #tpu.dot_dimension_numbers<[1], [0], [0], [1], [0, 0, 1, 1], [], []>} : vector<8x8xf32>, vector<8x8xf32>, vector<8x8xf32> -> vector<8x8xf32>
    %78 = vector.extract_strided_slice %45 {offsets = [0, 16], sizes = [8, 8], strides = [1, 1]} : vector<8x32xf32> to vector<8x8xf32>
    %79 = vector.extract_strided_slice %46 {offsets = [0, 16], sizes = [8, 8], strides = [1, 1]} : vector<8x32xf32> to vector<8x8xf32>
    %80 = vector.extract_strided_slice %47 {offsets = [0, 16], sizes = [8, 8], strides = [1, 1]} : vector<8x32xf32> to vector<8x8xf32>
    "tpu.trace_start"() <{level = 10 : i32, message = "qd,kd->qk"}> : () -> ()
    %cst_26 = arith.constant dense<0.000000e+00> : vector<8x8xf32>
    %81 = tpu.matmul %78, %79, %cst_26 {dimension_numbers = #tpu.dot_dimension_numbers<[1], [1], [0], [0], [0, 0, 1, 0], [], []>} : vector<8x8xf32>, vector<8x8xf32>, vector<8x8xf32> -> vector<8x8xf32>
    "tpu.trace_stop"() : () -> ()
    %cst_27 = arith.constant dense<0xFF800000> : vector<8xf32>
    %82 = vector.multi_reduction <maximumf>, %81, %cst_27 [1] : vector<8x8xf32> to vector<8xf32>
    %83 = vector.shape_cast %82 : vector<8xf32> to vector<8x1xf32>
    %84 = vector.broadcast %83 : vector<8x1xf32> to vector<8x8xf32>
    %85 = arith.subf %81, %84 : vector<8x8xf32>
    %86 = math.exp %85 : vector<8x8xf32>
    %cst_28 = arith.constant dense<0.000000e+00> : vector<8xf32>
    %87 = vector.multi_reduction <add>, %86, %cst_28 [1] : vector<8x8xf32> to vector<8xf32>
    %88 = vector.shape_cast %87 : vector<8xf32> to vector<8x1xf32>
    %89 = tpu.reciprocal %88 {approx = true} : vector<8x1xf32> -> vector<8x1xf32>
    %90 = vector.broadcast %89 : vector<8x1xf32> to vector<8x8xf32>
    %91 = arith.mulf %86, %90 : vector<8x8xf32>
    %cst_29 = arith.constant dense<0.000000e+00> : vector<8x8xf32>
    %92 = tpu.matmul %91, %80, %cst_29 {dimension_numbers = #tpu.dot_dimension_numbers<[1], [0], [0], [1], [0, 0, 1, 1], [], []>} : vector<8x8xf32>, vector<8x8xf32>, vector<8x8xf32> -> vector<8x8xf32>
    %93 = vector.extract_strided_slice %45 {offsets = [0, 24], sizes = [8, 8], strides = [1, 1]} : vector<8x32xf32> to vector<8x8xf32>
    %94 = vector.extract_strided_slice %46 {offsets = [0, 24], sizes = [8, 8], strides = [1, 1]} : vector<8x32xf32> to vector<8x8xf32>
    %95 = vector.extract_strided_slice %47 {offsets = [0, 24], sizes = [8, 8], strides = [1, 1]} : vector<8x32xf32> to vector<8x8xf32>
    "tpu.trace_start"() <{level = 10 : i32, message = "qd,kd->qk"}> : () -> ()
    %cst_30 = arith.constant dense<0.000000e+00> : vector<8x8xf32>
    %96 = tpu.matmul %93, %94, %cst_30 {dimension_numbers = #tpu.dot_dimension_numbers<[1], [1], [0], [0], [0, 0, 1, 0], [], []>} : vector<8x8xf32>, vector<8x8xf32>, vector<8x8xf32> -> vector<8x8xf32>
    "tpu.trace_stop"() : () -> ()
    %cst_31 = arith.constant dense<0xFF800000> : vector<8xf32>
    %97 = vector.multi_reduction <maximumf>, %96, %cst_31 [1] : vector<8x8xf32> to vector<8xf32>
    %98 = vector.shape_cast %97 : vector<8xf32> to vector<8x1xf32>
    %99 = vector.broadcast %98 : vector<8x1xf32> to vector<8x8xf32>
    %100 = arith.subf %96, %99 : vector<8x8xf32>
    %101 = math.exp %100 : vector<8x8xf32>
    %cst_32 = arith.constant dense<0.000000e+00> : vector<8xf32>
    %102 = vector.multi_reduction <add>, %101, %cst_32 [1] : vector<8x8xf32> to vector<8xf32>
    %103 = vector.shape_cast %102 : vector<8xf32> to vector<8x1xf32>
    %104 = tpu.reciprocal %103 {approx = true} : vector<8x1xf32> -> vector<8x1xf32>
    %105 = vector.broadcast %104 : vector<8x1xf32> to vector<8x8xf32>
    %106 = arith.mulf %101, %105 : vector<8x8xf32>
    %cst_33 = arith.constant dense<0.000000e+00> : vector<8x8xf32>
    %107 = tpu.matmul %106, %95, %cst_33 {dimension_numbers = #tpu.dot_dimension_numbers<[1], [0], [0], [1], [0, 0, 1, 1], [], []>} : vector<8x8xf32>, vector<8x8xf32>, vector<8x8xf32> -> vector<8x8xf32>
    %108 = tpu.concatenate %62, %77, %92, %107 in 1 : vector<8x8xf32>, vector<8x8xf32>, vector<8x8xf32>, vector<8x8xf32> -> vector<8x32xf32>
    %109 = vector.extract_strided_slice %44 {offsets = [8, 0], sizes = [8, 32], strides = [1, 1]} : vector<16x96xf32> to vector<8x32xf32>
    %110 = vector.extract_strided_slice %44 {offsets = [8, 32], sizes = [8, 32], strides = [1, 1]} : vector<16x96xf32> to vector<8x32xf32>
    %111 = vector.extract_strided_slice %44 {offsets = [8, 64], sizes = [8, 32], strides = [1, 1]} : vector<16x96xf32> to vector<8x32xf32>
    %112 = vector.extract_strided_slice %109 {offsets = [0, 0], sizes = [8, 8], strides = [1, 1]} : vector<8x32xf32> to vector<8x8xf32>
    %113 = vector.extract_strided_slice %110 {offsets = [0, 0], sizes = [8, 8], strides = [1, 1]} : vector<8x32xf32> to vector<8x8xf32>
    %114 = vector.extract_strided_slice %111 {offsets = [0, 0], sizes = [8, 8], strides = [1, 1]} : vector<8x32xf32> to vector<8x8xf32>
    "tpu.trace_start"() <{level = 10 : i32, message = "qd,kd->qk"}> : () -> ()
    %cst_34 = arith.constant dense<0.000000e+00> : vector<8x8xf32>
    %115 = tpu.matmul %112, %113, %cst_34 {dimension_numbers = #tpu.dot_dimension_numbers<[1], [1], [0], [0], [0, 0, 1, 0], [], []>} : vector<8x8xf32>, vector<8x8xf32>, vector<8x8xf32> -> vector<8x8xf32>
    "tpu.trace_stop"() : () -> ()
    %cst_35 = arith.constant dense<0xFF800000> : vector<8xf32>
    %116 = vector.multi_reduction <maximumf>, %115, %cst_35 [1] : vector<8x8xf32> to vector<8xf32>
    %117 = vector.shape_cast %116 : vector<8xf32> to vector<8x1xf32>
    %118 = vector.broadcast %117 : vector<8x1xf32> to vector<8x8xf32>
    %119 = arith.subf %115, %118 : vector<8x8xf32>
    %120 = math.exp %119 : vector<8x8xf32>
    %cst_36 = arith.constant dense<0.000000e+00> : vector<8xf32>
    %121 = vector.multi_reduction <add>, %120, %cst_36 [1] : vector<8x8xf32> to vector<8xf32>
    %122 = vector.shape_cast %121 : vector<8xf32> to vector<8x1xf32>
    %123 = tpu.reciprocal %122 {approx = true} : vector<8x1xf32> -> vector<8x1xf32>
    %124 = vector.broadcast %123 : vector<8x1xf32> to vector<8x8xf32>
    %125 = arith.mulf %120, %124 : vector<8x8xf32>
    %cst_37 = arith.constant dense<0.000000e+00> : vector<8x8xf32>
    %126 = tpu.matmul %125, %114, %cst_37 {dimension_numbers = #tpu.dot_dimension_numbers<[1], [0], [0], [1], [0, 0, 1, 1], [], []>} : vector<8x8xf32>, vector<8x8xf32>, vector<8x8xf32> -> vector<8x8xf32>
    %127 = vector.extract_strided_slice %109 {offsets = [0, 8], sizes = [8, 8], strides = [1, 1]} : vector<8x32xf32> to vector<8x8xf32>
    %128 = vector.extract_strided_slice %110 {offsets = [0, 8], sizes = [8, 8], strides = [1, 1]} : vector<8x32xf32> to vector<8x8xf32>
    %129 = vector.extract_strided_slice %111 {offsets = [0, 8], sizes = [8, 8], strides = [1, 1]} : vector<8x32xf32> to vector<8x8xf32>
    "tpu.trace_start"() <{level = 10 : i32, message = "qd,kd->qk"}> : () -> ()
    %cst_38 = arith.constant dense<0.000000e+00> : vector<8x8xf32>
    %130 = tpu.matmul %127, %128, %cst_38 {dimension_numbers = #tpu.dot_dimension_numbers<[1], [1], [0], [0], [0, 0, 1, 0], [], []>} : vector<8x8xf32>, vector<8x8xf32>, vector<8x8xf32> -> vector<8x8xf32>
    "tpu.trace_stop"() : () -> ()
    %cst_39 = arith.constant dense<0xFF800000> : vector<8xf32>
    %131 = vector.multi_reduction <maximumf>, %130, %cst_39 [1] : vector<8x8xf32> to vector<8xf32>
    %132 = vector.shape_cast %131 : vector<8xf32> to vector<8x1xf32>
    %133 = vector.broadcast %132 : vector<8x1xf32> to vector<8x8xf32>
    %134 = arith.subf %130, %133 : vector<8x8xf32>
    %135 = math.exp %134 : vector<8x8xf32>
    %cst_40 = arith.constant dense<0.000000e+00> : vector<8xf32>
    %136 = vector.multi_reduction <add>, %135, %cst_40 [1] : vector<8x8xf32> to vector<8xf32>
    %137 = vector.shape_cast %136 : vector<8xf32> to vector<8x1xf32>
    %138 = tpu.reciprocal %137 {approx = true} : vector<8x1xf32> -> vector<8x1xf32>
    %139 = vector.broadcast %138 : vector<8x1xf32> to vector<8x8xf32>
    %140 = arith.mulf %135, %139 : vector<8x8xf32>
    %cst_41 = arith.constant dense<0.000000e+00> : vector<8x8xf32>
    %141 = tpu.matmul %140, %129, %cst_41 {dimension_numbers = #tpu.dot_dimension_numbers<[1], [0], [0], [1], [0, 0, 1, 1], [], []>} : vector<8x8xf32>, vector<8x8xf32>, vector<8x8xf32> -> vector<8x8xf32>
    %142 = vector.extract_strided_slice %109 {offsets = [0, 16], sizes = [8, 8], strides = [1, 1]} : vector<8x32xf32> to vector<8x8xf32>
    %143 = vector.extract_strided_slice %110 {offsets = [0, 16], sizes = [8, 8], strides = [1, 1]} : vector<8x32xf32> to vector<8x8xf32>
    %144 = vector.extract_strided_slice %111 {offsets = [0, 16], sizes = [8, 8], strides = [1, 1]} : vector<8x32xf32> to vector<8x8xf32>
    "tpu.trace_start"() <{level = 10 : i32, message = "qd,kd->qk"}> : () -> ()
    %cst_42 = arith.constant dense<0.000000e+00> : vector<8x8xf32>
    %145 = tpu.matmul %142, %143, %cst_42 {dimension_numbers = #tpu.dot_dimension_numbers<[1], [1], [0], [0], [0, 0, 1, 0], [], []>} : vector<8x8xf32>, vector<8x8xf32>, vector<8x8xf32> -> vector<8x8xf32>
    "tpu.trace_stop"() : () -> ()
    %cst_43 = arith.constant dense<0xFF800000> : vector<8xf32>
    %146 = vector.multi_reduction <maximumf>, %145, %cst_43 [1] : vector<8x8xf32> to vector<8xf32>
    %147 = vector.shape_cast %146 : vector<8xf32> to vector<8x1xf32>
    %148 = vector.broadcast %147 : vector<8x1xf32> to vector<8x8xf32>
    %149 = arith.subf %145, %148 : vector<8x8xf32>
    %150 = math.exp %149 : vector<8x8xf32>
    %cst_44 = arith.constant dense<0.000000e+00> : vector<8xf32>
    %151 = vector.multi_reduction <add>, %150, %cst_44 [1] : vector<8x8xf32> to vector<8xf32>
    %152 = vector.shape_cast %151 : vector<8xf32> to vector<8x1xf32>
    %153 = tpu.reciprocal %152 {approx = true} : vector<8x1xf32> -> vector<8x1xf32>
    %154 = vector.broadcast %153 : vector<8x1xf32> to vector<8x8xf32>
    %155 = arith.mulf %150, %154 : vector<8x8xf32>
    %cst_45 = arith.constant dense<0.000000e+00> : vector<8x8xf32>
    %156 = tpu.matmul %155, %144, %cst_45 {dimension_numbers = #tpu.dot_dimension_numbers<[1], [0], [0], [1], [0, 0, 1, 1], [], []>} : vector<8x8xf32>, vector<8x8xf32>, vector<8x8xf32> -> vector<8x8xf32>
    %157 = vector.extract_strided_slice %109 {offsets = [0, 24], sizes = [8, 8], strides = [1, 1]} : vector<8x32xf32> to vector<8x8xf32>
    %158 = vector.extract_strided_slice %110 {offsets = [0, 24], sizes = [8, 8], strides = [1, 1]} : vector<8x32xf32> to vector<8x8xf32>
    %159 = vector.extract_strided_slice %111 {offsets = [0, 24], sizes = [8, 8], strides = [1, 1]} : vector<8x32xf32> to vector<8x8xf32>
    "tpu.trace_start"() <{level = 10 : i32, message = "qd,kd->qk"}> : () -> ()
    %cst_46 = arith.constant dense<0.000000e+00> : vector<8x8xf32>
    %160 = tpu.matmul %157, %158, %cst_46 {dimension_numbers = #tpu.dot_dimension_numbers<[1], [1], [0], [0], [0, 0, 1, 0], [], []>} : vector<8x8xf32>, vector<8x8xf32>, vector<8x8xf32> -> vector<8x8xf32>
    "tpu.trace_stop"() : () -> ()
    %cst_47 = arith.constant dense<0xFF800000> : vector<8xf32>
    %161 = vector.multi_reduction <maximumf>, %160, %cst_47 [1] : vector<8x8xf32> to vector<8xf32>
    %162 = vector.shape_cast %161 : vector<8xf32> to vector<8x1xf32>
    %163 = vector.broadcast %162 : vector<8x1xf32> to vector<8x8xf32>
    %164 = arith.subf %160, %163 : vector<8x8xf32>
    %165 = math.exp %164 : vector<8x8xf32>
    %cst_48 = arith.constant dense<0.000000e+00> : vector<8xf32>
    %166 = vector.multi_reduction <add>, %165, %cst_48 [1] : vector<8x8xf32> to vector<8xf32>
    %167 = vector.shape_cast %166 : vector<8xf32> to vector<8x1xf32>
    %168 = tpu.reciprocal %167 {approx = true} : vector<8x1xf32> -> vector<8x1xf32>
    %169 = vector.broadcast %168 : vector<8x1xf32> to vector<8x8xf32>
    %170 = arith.mulf %165, %169 : vector<8x8xf32>
    %cst_49 = arith.constant dense<0.000000e+00> : vector<8x8xf32>
    %171 = tpu.matmul %170, %159, %cst_49 {dimension_numbers = #tpu.dot_dimension_numbers<[1], [0], [0], [1], [0, 0, 1, 1], [], []>} : vector<8x8xf32>, vector<8x8xf32>, vector<8x8xf32> -> vector<8x8xf32>
    %172 = tpu.concatenate %126, %141, %156, %171 in 1 : vector<8x8xf32>, vector<8x8xf32>, vector<8x8xf32>, vector<8x8xf32> -> vector<8x32xf32>
    %173 = tpu.concatenate %108, %172 in 0 : vector<8x32xf32>, vector<8x32xf32> -> vector<16x32xf32>
    %cst_50 = arith.constant dense<0.000000e+00> : vector<16x32xf32>
    %174 = tpu.matmul %173, %14, %cst_50 {dimension_numbers = #tpu.dot_dimension_numbers<[1], [0], [0], [1], [0, 0, 1, 1], [], []>} : vector<16x32xf32>, vector<32x32xf32>, vector<16x32xf32> -> vector<16x32xf32>
    %175 = arith.addf %19, %174 : vector<16x32xf32>
    %176 = vector.broadcast %8 : vector<1x32xf32> to vector<16x32xf32>
    %177 = arith.addf %175, %176 : vector<16x32xf32>
    %c0_51 = arith.constant 0 : index
    %c0_52 = arith.constant 0 : index
    %178 = vector.load %arg1[%c0_51, %c0_52] : memref<2x32xf32, #tpu.memory_space<vmem>>, vector<1x32xf32>
    %179 = vector.shape_cast %178 : vector<1x32xf32> to vector<1x32xf32>
    %180 = vector.broadcast %179 : vector<1x32xf32> to vector<8x32xf32>
    %c1 = arith.constant 1 : index
    %c0_53 = arith.constant 0 : index
    %181 = vector.load %arg1[%c1, %c0_53] : memref<2x32xf32, #tpu.memory_space<vmem>>, vector<1x32xf32>
    %182 = vector.shape_cast %181 : vector<1x32xf32> to vector<1x32xf32>
    %183 = vector.broadcast %182 : vector<1x32xf32> to vector<8x32xf32>
    %184 = tpu.concatenate %180, %183 in 0 : vector<8x32xf32>, vector<8x32xf32> -> vector<16x32xf32>
    %185 = arith.addf %177, %184 : vector<16x32xf32>
    %cst_54 = arith.constant dense<0.000000e+00> : vector<16xf32>
    %186 = vector.multi_reduction <add>, %185, %cst_54 [1] : vector<16x32xf32> to vector<16xf32>
    %187 = vector.shape_cast %186 : vector<16xf32> to vector<16x1xf32>
    %cst_55 = arith.constant 3.200000e+01 : f32
    %188 = vector.broadcast %cst_55 : f32 to vector<16x1xf32>
    %189 = arith.divf %187, %188 : vector<16x1xf32>
    %190 = vector.broadcast %189 : vector<16x1xf32> to vector<16x32xf32>
    %191 = arith.subf %185, %190 : vector<16x32xf32>
    %192 = arith.mulf %191, %191 : vector<16x32xf32>
    %cst_56 = arith.constant dense<0.000000e+00> : vector<16xf32>
    %193 = vector.multi_reduction <add>, %192, %cst_56 [1] : vector<16x32xf32> to vector<16xf32>
    %194 = vector.shape_cast %193 : vector<16xf32> to vector<16x1xf32>
    %cst_57 = arith.constant 3.200000e+01 : f32
    %195 = vector.broadcast %cst_57 : f32 to vector<16x1xf32>
    %196 = arith.divf %194, %195 : vector<16x1xf32>
    %197 = vector.broadcast %189 : vector<16x1xf32> to vector<16x32xf32>
    %198 = arith.subf %185, %197 : vector<16x32xf32>
    %cst_58 = arith.constant 9.99999974E-6 : f32
    %199 = vector.broadcast %cst_58 : f32 to vector<16x1xf32>
    %200 = arith.addf %196, %199 : vector<16x1xf32>
    %201 = math.rsqrt %200 : vector<16x1xf32>
    %202 = vector.broadcast %201 : vector<16x1xf32> to vector<16x32xf32>
    %203 = arith.mulf %198, %202 : vector<16x32xf32>
    %204 = vector.broadcast %3 : vector<1x32xf32> to vector<16x32xf32>
    %205 = arith.mulf %203, %204 : vector<16x32xf32>
    %206 = vector.broadcast %4 : vector<1x32xf32> to vector<16x32xf32>
    %207 = arith.addf %205, %206 : vector<16x32xf32>
    %cst_59 = arith.constant dense<0.000000e+00> : vector<16x64xf32>
    %208 = tpu.matmul %207, %15, %cst_59 {dimension_numbers = #tpu.dot_dimension_numbers<[1], [0], [0], [1], [0, 0, 1, 1], [], []>} : vector<16x32xf32>, vector<32x64xf32>, vector<16x64xf32> -> vector<16x64xf32>
    %209 = vector.broadcast %9 : vector<1x64xf32> to vector<16x64xf32>
    %210 = arith.addf %208, %209 : vector<16x64xf32>
    %211 = arith.negf %210 : vector<16x64xf32>
    %212 = math.exp %211 : vector<16x64xf32>
    %cst_60 = arith.constant 1.000000e+00 : f32
    %213 = vector.broadcast %cst_60 : f32 to vector<16x64xf32>
    %214 = arith.addf %213, %212 : vector<16x64xf32>
    %215 = arith.divf %213, %214 : vector<16x64xf32>
    %216 = arith.mulf %210, %215 : vector<16x64xf32>
    %217 = arith.addf %185, %207 : vector<16x32xf32>
    %cst_61 = arith.constant dense<0.000000e+00> : vector<16x32xf32>
    %218 = tpu.matmul %216, %17, %cst_61 {dimension_numbers = #tpu.dot_dimension_numbers<[1], [0], [0], [1], [0, 0, 1, 1], [], []>} : vector<16x64xf32>, vector<64x32xf32>, vector<16x32xf32> -> vector<16x32xf32>
    %219 = arith.addf %217, %218 : vector<16x32xf32>
    %220 = vector.broadcast %11 : vector<1x32xf32> to vector<16x32xf32>
    %221 = arith.addf %219, %220 : vector<16x32xf32>
    %cst_62 = arith.constant dense<0.000000e+00> : vector<16xf32>
    %222 = vector.multi_reduction <add>, %221, %cst_62 [1] : vector<16x32xf32> to vector<16xf32>
    %223 = vector.shape_cast %222 : vector<16xf32> to vector<16x1xf32>
    %cst_63 = arith.constant 3.200000e+01 : f32
    %224 = vector.broadcast %cst_63 : f32 to vector<16x1xf32>
    %225 = arith.divf %223, %224 : vector<16x1xf32>
    %226 = vector.broadcast %225 : vector<16x1xf32> to vector<16x32xf32>
    %227 = arith.subf %221, %226 : vector<16x32xf32>
    %228 = arith.mulf %227, %227 : vector<16x32xf32>
    %cst_64 = arith.constant dense<0.000000e+00> : vector<16xf32>
    %229 = vector.multi_reduction <add>, %228, %cst_64 [1] : vector<16x32xf32> to vector<16xf32>
    %230 = vector.shape_cast %229 : vector<16xf32> to vector<16x1xf32>
    %cst_65 = arith.constant 3.200000e+01 : f32
    %231 = vector.broadcast %cst_65 : f32 to vector<16x1xf32>
    %232 = arith.divf %230, %231 : vector<16x1xf32>
    %233 = vector.broadcast %225 : vector<16x1xf32> to vector<16x32xf32>
    %234 = arith.subf %221, %233 : vector<16x32xf32>
    %cst_66 = arith.constant 9.99999974E-6 : f32
    %235 = vector.broadcast %cst_66 : f32 to vector<16x1xf32>
    %236 = arith.addf %232, %235 : vector<16x1xf32>
    %237 = math.rsqrt %236 : vector<16x1xf32>
    %238 = vector.broadcast %237 : vector<16x1xf32> to vector<16x32xf32>
    %239 = arith.mulf %234, %238 : vector<16x32xf32>
    %240 = vector.broadcast %5 : vector<1x32xf32> to vector<16x32xf32>
    %241 = arith.mulf %239, %240 : vector<16x32xf32>
    %242 = vector.broadcast %6 : vector<1x32xf32> to vector<16x32xf32>
    %243 = arith.addf %241, %242 : vector<16x32xf32>
    %cst_67 = arith.constant dense<0.000000e+00> : vector<16x64xf32>
    %244 = tpu.matmul %243, %16, %cst_67 {dimension_numbers = #tpu.dot_dimension_numbers<[1], [0], [0], [1], [0, 0, 1, 1], [], []>} : vector<16x32xf32>, vector<32x64xf32>, vector<16x64xf32> -> vector<16x64xf32>
    %245 = vector.broadcast %10 : vector<1x64xf32> to vector<16x64xf32>
    %246 = arith.addf %244, %245 : vector<16x64xf32>
    %247 = arith.negf %246 : vector<16x64xf32>
    %248 = math.exp %247 : vector<16x64xf32>
    %cst_68 = arith.constant 1.000000e+00 : f32
    %249 = vector.broadcast %cst_68 : f32 to vector<16x64xf32>
    %250 = arith.addf %249, %248 : vector<16x64xf32>
    %251 = arith.divf %249, %250 : vector<16x64xf32>
    %252 = arith.mulf %246, %251 : vector<16x64xf32>
    %cst_69 = arith.constant dense<0.000000e+00> : vector<16x32xf32>
    %253 = tpu.matmul %252, %18, %cst_69 {dimension_numbers = #tpu.dot_dimension_numbers<[1], [0], [0], [1], [0, 0, 1, 1], [], []>} : vector<16x64xf32>, vector<64x32xf32>, vector<16x32xf32> -> vector<16x32xf32>
    %254 = arith.addf %221, %253 : vector<16x32xf32>
    %255 = vector.broadcast %12 : vector<1x32xf32> to vector<16x32xf32>
    %256 = arith.addf %254, %255 : vector<16x32xf32>
    %c0_70 = arith.constant 0 : index
    %c0_71 = arith.constant 0 : index
    %257 = vector.load %arg6[%c0_70, %c0_71] : memref<16x32xf32, #tpu.memory_space<vmem>>, vector<16x32xf32>
    tpu.vector_store %arg6[%c0_70, %c0_71], %256 {strides = array<i32>} : memref<16x32xf32, #tpu.memory_space<vmem>>, vector<16x32xf32>,
    return
  }
}

</mosaic_0001>

<llo_original>
// kernel: tpu_custom_call.1
$region0: #{tpu_custom_call.1}
  #allocation0 [shape = 'u32[]', space=smem, size = 0x4, offset = 0x4, fixed_abs, tag = 'smem constant byte address 0x4 - core index']
  #allocation1 [shape = 'u32[144,128]{1,0:T(1,128)}', space=vmem, size = 0x12000, scoped, tag = 'internal scratch']
  %s0 = inlined_call_operand.vmem [shape: f32[16,32], index: 0, kind: input, shape index: {}]
  %s1 = inlined_call_operand.vmem [shape: f32[2,32], index: 1, kind: input, shape index: {}]
  %s2 = inlined_call_operand.vmem [shape: f32[16,128], index: 2, kind: input, shape index: {}]
  %s3 = inlined_call_operand.vmem [shape: f32[32,128], index: 3, kind: input, shape index: {}]
  %s4 = inlined_call_operand.vmem [shape: f32[32,128], index: 4, kind: input, shape index: {}]
  %s5 = inlined_call_operand.vmem [shape: f32[128,32], index: 5, kind: input, shape index: {}]
  %s6 = inlined_call_operand.hbm [shape: f32[16,32], index: 6, kind: output, shape index: {}]
  %s7 = sld [smem:[#allocation0]]
  $region34: #{tpu_custom_call.1} parent=0
    _
  %s9 = ssub.s32 1, %s7
  %s10 = scalar_select 0, %s9, %s7
  $region1: #{tpu_custom_call.1} parent=0
    #allocation2 [shape = 'u8[8192]{0}', space=vmem, size = 0x2000, scoped, tag = 'output window, operand 0, single buffered']
    #allocation3 [shape = 's32[1]{0}', space=sflag, size = 0x4, scoped, tag = 'scoped memory for tpu_custom_call.1']
    %11 = vsyncpa [#allocation3], 0
    // Predicated region
    $region2: #{tpu_custom_call.1} parent=1 // pred_check
      _
    $region3: #{tpu_custom_call.1} parent=1 // pred_check_branch
      %13 = sbr.rel (0) target = $region5
    $region4: #{tpu_custom_call.1} parent=1 // pred_region
      _
    $region5: #{tpu_custom_call.1} parent=1 // pred_fallthru
      _
    // Predicated region
    $region6: #{tpu_custom_call.1} parent=1 // pred_check
      _
    $region7: #{tpu_custom_call.1} parent=1 // pred_check_branch
      %15 = sbr.rel (0) target = $region9
    $region8: #{tpu_custom_call.1} parent=1 // pred_region
      _
    $region9: #{tpu_custom_call.1} parent=1 // pred_fallthru
      _
    // Predicated region
    $region10: #{tpu_custom_call.1} parent=1 // pred_check
      _
    $region11: #{tpu_custom_call.1} parent=1 // pred_check_branch
      %17 = sbr.rel (0) target = $region13
    $region12: #{tpu_custom_call.1} parent=1 // pred_region
      _
    $region13: #{tpu_custom_call.1} parent=1 // pred_fallthru
      _
    // Predicated region
    $region14: #{tpu_custom_call.1} parent=1 // pred_check
      _
    $region15: #{tpu_custom_call.1} parent=1 // pred_check_branch
      %19 = sbr.rel (0) target = $region17
    $region16: #{tpu_custom_call.1} parent=1 // pred_region
      _
    $region17: #{tpu_custom_call.1} parent=1 // pred_fallthru
      _
    // Predicated region
    $region18: #{tpu_custom_call.1} parent=1 // pred_check
      _
    $region19: #{tpu_custom_call.1} parent=1 // pred_check_branch
      %21 = sbr.rel (0) target = $region21
    $region20: #{tpu_custom_call.1} parent=1 // pred_region
      _
    $region21: #{tpu_custom_call.1} parent=1 // pred_fallthru
      _
    // Predicated region
    $region22: #{tpu_custom_call.1} parent=1 // pred_check
      _
    $region23: #{tpu_custom_call.1} parent=1 // pred_check_branch
      %23 = sbr.rel (0) target = $region25
    $region24: #{tpu_custom_call.1} parent=1 // pred_region
      _
    $region25: #{tpu_custom_call.1} parent=1 // pred_fallthru
      _
    %v24 = vld [vmem:[%s2] sm:$0xff]
    %v25 = vld [vmem:[%s2 + $0x8] sm:$0xff]
    %v26 = vld [vmem:[%s3] sm:$0xff]
    %v27 = vld [vmem:[%s3 + $0x8] sm:$0xff]
    %v28 = vld [vmem:[%s3 + $0x10] sm:$0xff]
    %v29 = vld [vmem:[%s3 + $0x18] sm:$0xff]
    %v30 = vld [vmem:[%s4] sm:$0xff]
    %v31 = vld [vmem:[%s4 + $0x8] sm:$0xff]
    %v32 = vld [vmem:[%s4 + $0x10] sm:$0xff]
    %v33 = vld [vmem:[%s4 + $0x18] sm:$0xff]
    %v34 = vld [vmem:[%s5] sm:$0xff]
    %v35 = vld [vmem:[%s5 + $0x8] sm:$0xff]
    %v36 = vld [vmem:[%s5 + $0x10] sm:$0xff]
    %v37 = vld [vmem:[%s5 + $0x18] sm:$0xff]
    %v38 = vld [vmem:[%s5 + $0x20] sm:$0xff]
    %v39 = vld [vmem:[%s5 + $0x28] sm:$0xff]
    %v40 = vld [vmem:[%s5 + $0x30] sm:$0xff]
    %v41 = vld [vmem:[%s5 + $0x38] sm:$0xff]
    %v42 = vld [vmem:[%s5 + $0x40] sm:$0xff]
    %v43 = vld [vmem:[%s5 + $0x48] sm:$0xff]
    %v44 = vld [vmem:[%s5 + $0x50] sm:$0xff]
    %v45 = vld [vmem:[%s5 + $0x58] sm:$0xff]
    %v46 = vld [vmem:[%s5 + $0x60] sm:$0xff]
    %v47 = vld [vmem:[%s5 + $0x68] sm:$0xff]
    %v48 = vld [vmem:[%s5 + $0x70] sm:$0xff]
    %v49 = vld [vmem:[%s5 + $0x78] sm:$0xff]
    %v50 = vld [vmem:[%s0] sm:$0xff]
    %v51 = vld [vmem:[%s0 + $0x8] sm:$0xff]
    %vm52 = vcmask 261120
    %v53 = vsel %vm52, %v50, 0.0
    %54 = vadd.xlane.f32.xlu0 %v53
    %v55 = vpop.xlane.xlu0 %54
    %v56 = vsel %vm52, %v51, 0.0
    %57 = vadd.xlane.f32.xlu0 %v56
    %v58 = vpop.xlane.xlu0 %57
    %v59 = vrcp.pop 32.0
    %v60 = vmul.f32 %v55, %v59
    %v61 = vmul.f32 %v58, %v59
    %v62 = vsub.f32 %v50, %v60
    %v63 = vsub.f32 %v51, %v61
    %v64 = vmul.f32 %v62, %v62
    %v65 = vmul.f32 %v63, %v63
    %v66 = vsel %vm52, %v64, 0.0
    %67 = vadd.xlane.f32.xlu0 %v66
    %v68 = vpop.xlane.xlu0 %67
    %v69 = vsel %vm52, %v65, 0.0
    %70 = vadd.xlane.f32.xlu0 %v69
    %v71 = vpop.xlane.xlu0 %70
    %v72 = vmul.f32 %v68, %v59
    %v73 = vmul.f32 %v71, %v59
    %v74 = vadd.f32 %v72, 1e-05
    %v75 = vadd.f32 %v73, 1e-05
    %v76 = vrsqrt.pop %v74
    %v77 = vrsqrt.pop %v75
    %v78 = vmul.f32 %v62, %v76
    %v79 = vmul.f32 %v63, %v77
    %v80 = vlaneseq
    %v81 = vshrl.u32 %v80, 7
    %v82 = vsub.s32 0, %v81
    %v83 = vrot.slane %v24, %v82
    %v84 = vmul.f32 %v78, %v83
    %v85 = vmul.f32 %v79, %v83
    %v86 = vlaneseq
    %v87 = vshrl.u32 %v86, 7
    %v88 = vsub.s32 1, %v87
    %v89 = vrot.slane %v24, %v88
    %v90 = vadd.f32 %v84, %v89
    %v91 = vadd.f32 %v85, %v89
    %v92 = vlaneseq
    %v93 = vshrl.u32 %v92, 7
    %v94 = vsub.s32 6, %v93
    %v95 = vrot.slane %v24, %v94
    %v97 = vsel %vm52, %v90, 0
    %v100 = vsel %vm52, %v91, 0
    %102 = vmatprep.subr.mxu0 0.0
    %103 = vmatpush1.msra.mxu0 %v26
    %104 = vmatprep.subr.mxu0 0.0
    %105 = vmatpush1.msra.mxu0 %v27
    %106 = vmatprep.subr.mxu0 0.0
    %107 = vmatpush1.msra.mxu0 %v28
    %108 = vmatprep.subr.mxu0 0.0
    %109 = vmatpush1.msra.mxu0 %v29
    %110 = vmatprep.subr.mxu0 0.0
    %111 = vmatpush1.msra.mxu0 0.0
    %112 = vmatprep.subr.mxu0 0.0
    %113 = vmatpush1.msra.mxu0 0.0
    %114 = vmatprep.subr.mxu0 0.0
    %115 = vmatpush1.msra.mxu0 0.0
    %116 = vmatprep.subr.mxu0 0.0
    %117 = vmatpush1.msra.mxu0 0.0
    %118 = vmatprep.subr.mxu0 0.0
    %119 = vmatpush1.msra.mxu0 0.0
    %120 = vmatprep.subr.mxu0 0.0
    %121 = vmatpush1.msra.mxu0 0.0
    %122 = vmatprep.subr.mxu0 0.0
    %123 = vmatpush1.msra.mxu0 0.0
    %124 = vmatprep.subr.mxu0 0.0
    %125 = vmatpush1.msra.mxu0 0.0
    %126 = vmatprep.subr.mxu0 0.0
    %127 = vmatpush1.msra.mxu0 0.0
    %128 = vmatprep.subr.mxu0 0.0
    %129 = vmatpush1.msra.mxu0 0.0
    %130 = vmatprep.subr.mxu0 0.0
    %131 = vmatpush1.msra.mxu0 0.0
    %132 = vmatprep.subr.mxu0 0.0
    %133 = vmatpush1.msra.mxu0 0.0
    %134 = vmatprep.subr.mxu0 0.0
    %135 = vmatpush1.msra.mxu0 0.0
    %136 = vmatprep.subr.mxu0 0.0
    %137 = vmatpush1.msra.mxu0 0.0
    %138 = vmatprep.subr.mxu0 0.0
    %139 = vmatpush1.msra.mxu0 0.0
    %140 = vmatprep.subr.mxu0 0.0
    %141 = vmatpush1.msra.mxu0 0.0
    %142 = vmatprep.subr.mxu0 0.0
    %143 = vmatpush1.msra.mxu0 0.0
    %144 = vmatprep.subr.mxu0 0.0
    %145 = vmatpush1.msra.mxu0 0.0
    %146 = vmatprep.subr.mxu0 0.0
    %147 = vmatpush1.msra.mxu0 0.0
    %148 = vmatprep.subr.mxu0 0.0
    %149 = vmatpush1.msra.mxu0 0.0
    %150 = vmatprep.subr.mxu0 0.0
    %151 = vmatpush1.msra.mxu0 0.0
    %152 = vmatprep.subr.mxu0 0.0
    %153 = vmatpush1.msra.mxu0 0.0
    %154 = vmatprep.subr.mxu0 0.0
    %155 = vmatpush1.msra.mxu0 0.0
    %156 = vmatprep.subr.mxu0 0.0
    %157 = vmatpush1.msra.mxu0 0.0
    %158 = vmatprep.subr.mxu0 0.0
    %159 = vmatpush1.msra.mxu0 0.0
    %160 = vmatprep.subr.mxu0 0.0
    %161 = vmatpush1.msra.mxu0 0.0
    %162 = vmatprep.subr.mxu0 0.0
    %163 = vmatpush1.msra.mxu0 0.0
    %164 = vmatprep.subr.mxu0 0.0
    %165 = vmatpush1.msra.mxu0 0.0
    %166 = vmatprep.mubr.f32.mxu0 0.0
    %167 = vmatmul.mubr.f32.gmra.mrb[0].mxu0 %v97
    %v168 = vpop.f32.mrb[0].mxu0
    %v169 = vadd.f32 %v95, %v168
    %v170 = vpop.f32.mrb[0].mxu0
    %171 = vmatprep.mubr.f32.mxu0 0.0
    %172 = vmatmul.mubr.f32.gmra.mrb[0].mxu0 %v100
    %v173 = vpop.f32.mrb[0].mxu0
    %v174 = vadd.f32 %v95, %v173
    %v175 = vpop.f32.mrb[0].mxu0
    %176 = vdwg.mxu0
    %178 = vrot.lane.b32.xlu0 %v169, 96
    %v179 = vpop.permute.xlu0 %178
    %vm180 = vcmask 64512
    %v181 = vsel %vm180, %v169, 0
    %v183 = vsel %vm180, %v179, 0
    %185 = vmatprep.subr.mxu0 0.0
    %186 = vmatpush1.xpose.msra.mxu0 %v183
    %187 = vmatprep.subr.mxu0 0.0
    %188 = vmatpush1.xpose.msra.mxu0 0.0
    %189 = vmatprep.subr.mxu0 0.0
    %190 = vmatpush1.xpose.msra.mxu0 0.0
    %191 = vmatprep.subr.mxu0 0.0
    %192 = vmatpush1.xpose.msra.mxu0 0.0
    %193 = vmatprep.subr.mxu0 0.0
    %194 = vmatpush1.xpose.msra.mxu0 0.0
    %195 = vmatprep.subr.mxu0 0.0
    %196 = vmatpush1.xpose.msra.mxu0 0.0
    %197 = vmatprep.subr.mxu0 0.0
    %198 = vmatpush1.xpose.msra.mxu0 0.0
    %199 = vmatprep.subr.mxu0 0.0
    %200 = vmatpush1.xpose.msra.mxu0 0.0
    %201 = vmatprep.subr.mxu0 0.0
    %202 = vmatpush1.xpose.msra.mxu0 0.0
    %203 = vmatprep.subr.mxu0 0.0
    %204 = vmatpush1.xpose.msra.mxu0 0.0
    %205 = vmatprep.subr.mxu0 0.0
    %206 = vmatpush1.xpose.msra.mxu0 0.0
    %207 = vmatprep.subr.mxu0 0.0
    %208 = vmatpush1.xpose.msra.mxu0 0.0
    %209 = vmatprep.subr.mxu0 0.0
    %210 = vmatpush1.xpose.msra.mxu0 0.0
    %211 = vmatprep.subr.mxu0 0.0
    %212 = vmatpush1.xpose.msra.mxu0 0.0
    %213 = vmatprep.subr.mxu0 0.0
    %214 = vmatpush1.xpose.msra.mxu0 0.0
    %215 = vmatprep.subr.mxu0 0.0
    %216 = vmatpush1.xpose.msra.mxu0 0.0
    %217 = vmatprep.subr.mxu0 0.0
    %218 = vmatpush1.xpose.msra.mxu0 0.0
    %219 = vmatprep.subr.mxu0 0.0
    %220 = vmatpush1.xpose.msra.mxu0 0.0
    %221 = vmatprep.subr.mxu0 0.0
    %222 = vmatpush1.xpose.msra.mxu0 0.0
    %223 = vmatprep.subr.mxu0 0.0
    %224 = vmatpush1.xpose.msra.mxu0 0.0
    %225 = vmatprep.subr.mxu0 0.0
    %226 = vmatpush1.xpose.msra.mxu0 0.0
    %227 = vmatprep.subr.mxu0 0.0
    %228 = vmatpush1.xpose.msra.mxu0 0.0
    %229 = vmatprep.subr.mxu0 0.0
    %230 = vmatpush1.xpose.msra.mxu0 0.0
    %231 = vmatprep.subr.mxu0 0.0
    %232 = vmatpush1.xpose.msra.mxu0 0.0
    %233 = vmatprep.subr.mxu0 0.0
    %234 = vmatpush1.xpose.msra.mxu0 0.0
    %235 = vmatprep.subr.mxu0 0.0
    %236 = vmatpush1.xpose.msra.mxu0 0.0
    %237 = vmatprep.subr.mxu0 0.0
    %238 = vmatpush1.xpose.msra.mxu0 0.0
    %239 = vmatprep.subr.mxu0 0.0
    %240 = vmatpush1.xpose.msra.mxu0 0.0
    %241 = vmatprep.subr.mxu0 0.0
    %242 = vmatpush1.xpose.msra.mxu0 0.0
    %243 = vmatprep.subr.mxu0 0.0
    %244 = vmatpush1.xpose.msra.mxu0 0.0
    %245 = vmatprep.subr.mxu0 0.0
    %246 = vmatpush1.xpose.msra.mxu0 0.0
    %247 = vmatprep.subr.mxu0 0.0
    %248 = vmatpush1.xpose.msra.mxu0 0.0
    %249 = vmatprep.mubr.f32.mxu0 0.0
    %250 = vmatmul.mubr.f32.gmra.mrb[0].mxu0 %v181
    %v251 = vpop.f32.mrb[0].mxu0
    %v252 = vadd.f32 0.0, %v251
    %v253 = vpop.f32.mrb[0].mxu0
    %254 = vdwg.mxu0
    %v255 = vsel %vm180, %v252, -inf
    %256 = vmax.xlane.f32.xlu0 %v255
    %v257 = vpop.xlane.xlu0 %256
    %v258 = vsub.f32 %v252, %v257
    %v259 = vmul.f32 %v258, 1.442695
    %v260 = vpow.pop %v259
    %v261 = vsel %vm180, %v260, 0.0
    %262 = vadd.xlane.f32.xlu0 %v261
    %v263 = vpop.xlane.xlu0 %262
    %v264 = vrcp.pop %v263
    %v265 = vmul.f32 %v260, %v264
    %266 = vrot.lane.b32.xlu0 %v169, 64
    %v267 = vpop.permute.xlu0 %266
    %v270 = vsel %vm180, %v265, 0
    %272 = vmatprep.subr.mxu0 0.0
    %273 = vmatpush1.msra.mxu0 %v267
    %274 = vmatprep.subr.mxu0 0.0
    %275 = vmatpush1.msra.mxu0 0.0
    %276 = vmatprep.subr.mxu0 0.0
    %277 = vmatpush1.msra.mxu0 0.0
    %278 = vmatprep.subr.mxu0 0.0
    %279 = vmatpush1.msra.mxu0 0.0
    %280 = vmatprep.subr.mxu0 0.0
    %281 = vmatpush1.msra.mxu0 0.0
    %282 = vmatprep.subr.mxu0 0.0
    %283 = vmatpush1.msra.mxu0 0.0
    %284 = vmatprep.subr.mxu0 0.0
    %285 = vmatpush1.msra.mxu0 0.0
    %286 = vmatprep.subr.mxu0 0.0
    %287 = vmatpush1.msra.mxu0 0.0
    %288 = vmatprep.subr.mxu0 0.0
    %289 = vmatpush1.msra.mxu0 0.0
    %290 = vmatprep.subr.mxu0 0.0
    %291 = vmatpush1.msra.mxu0 0.0
    %292 = vmatprep.subr.mxu0 0.0
    %293 = vmatpush1.msra.mxu0 0.0
    %294 = vmatprep.subr.mxu0 0.0
    %295 = vmatpush1.msra.mxu0 0.0
    %296 = vmatprep.subr.mxu0 0.0
    %297 = vmatpush1.msra.mxu0 0.0
    %298 = vmatprep.subr.mxu0 0.0
    %299 = vmatpush1.msra.mxu0 0.0
    %300 = vmatprep.subr.mxu0 0.0
    %301 = vmatpush1.msra.mxu0 0.0
    %302 = vmatprep.subr.mxu0 0.0
    %303 = vmatpush1.msra.mxu0 0.0
    %304 = vmatprep.subr.mxu0 0.0
    %305 = vmatpush1.msra.mxu0 0.0
    %306 = vmatprep.subr.mxu0 0.0
    %307 = vmatpush1.msra.mxu0 0.0
    %308 = vmatprep.subr.mxu0 0.0
    %309 = vmatpush1.msra.mxu0 0.0
    %310 = vmatprep.subr.mxu0 0.0
    %311 = vmatpush1.msra.mxu0 0.0
    %312 = vmatprep.subr.mxu0 0.0
    %313 = vmatpush1.msra.mxu0 0.0
    %314 = vmatprep.subr.mxu0 0.0
    %315 = vmatpush1.msra.mxu0 0.0
    %316 = vmatprep.subr.mxu0 0.0
    %317 = vmatpush1.msra.mxu0 0.0
    %318 = vmatprep.subr.mxu0 0.0
    %319 = vmatpush1.msra.mxu0 0.0
    %320 = vmatprep.subr.mxu0 0.0
    %321 = vmatpush1.msra.mxu0 0.0
    %322 = vmatprep.subr.mxu0 0.0
    %323 = vmatpush1.msra.mxu0 0.0
    %324 = vmatprep.subr.mxu0 0.0
    %325 = vmatpush1.msra.mxu0 0.0
    %326 = vmatprep.subr.mxu0 0.0
    %327 = vmatpush1.msra.mxu0 0.0
    %328 = vmatprep.subr.mxu0 0.0
    %329 = vmatpush1.msra.mxu0 0.0
    %330 = vmatprep.subr.mxu0 0.0
    %331 = vmatpush1.msra.mxu0 0.0
    %332 = vmatprep.subr.mxu0 0.0
    %333 = vmatpush1.msra.mxu0 0.0
    %334 = vmatprep.subr.mxu0 0.0
    %335 = vmatpush1.msra.mxu0 0.0
    %336 = vmatprep.mubr.f32.mxu0 0.0
    %337 = vmatmul.mubr.f32.gmra.mrb[0].mxu0 %v270
    %v338 = vpop.f32.mrb[0].mxu0
    %v339 = vadd.f32 0.0, %v338
    %v340 = vpop.f32.mrb[0].mxu0
    %341 = vdwg.mxu0
    %342 = vrot.lane.b32.xlu0 %v169, 120
    %v343 = vpop.permute.xlu0 %342
    %344 = vrot.lane.b32.xlu0 %v169, 88
    %v345 = vpop.permute.xlu0 %344
    %v346 = vsel %vm180, %v343, 0
    %v348 = vsel %vm180, %v345, 0
    %350 = vmatprep.subr.mxu0 0.0
    %351 = vmatpush1.xpose.msra.mxu0 %v348
    %352 = vmatprep.subr.mxu0 0.0
    %353 = vmatpush1.xpose.msra.mxu0 0.0
    %354 = vmatprep.subr.mxu0 0.0
    %355 = vmatpush1.xpose.msra.mxu0 0.0
    %356 = vmatprep.subr.mxu0 0.0
    %357 = vmatpush1.xpose.msra.mxu0 0.0
    %358 = vmatprep.subr.mxu0 0.0
    %359 = vmatpush1.xpose.msra.mxu0 0.0
    %360 = vmatprep.subr.mxu0 0.0
    %361 = vmatpush1.xpose.msra.mxu0 0.0
    %362 = vmatprep.subr.mxu0 0.0
    %363 = vmatpush1.xpose.msra.mxu0 0.0
    %364 = vmatprep.subr.mxu0 0.0
    %365 = vmatpush1.xpose.msra.mxu0 0.0
    %366 = vmatprep.subr.mxu0 0.0
    %367 = vmatpush1.xpose.msra.mxu0 0.0
    %368 = vmatprep.subr.mxu0 0.0
    %369 = vmatpush1.xpose.msra.mxu0 0.0
    %370 = vmatprep.subr.mxu0 0.0
    %371 = vmatpush1.xpose.msra.mxu0 0.0
    %372 = vmatprep.subr.mxu0 0.0
    %373 = vmatpush1.xpose.msra.mxu0 0.0
    %374 = vmatprep.subr.mxu0 0.0
    %375 = vmatpush1.xpose.msra.mxu0 0.0
    %376 = vmatprep.subr.mxu0 0.0
    %377 = vmatpush1.xpose.msra.mxu0 0.0
    %378 = vmatprep.subr.mxu0 0.0
    %379 = vmatpush1.xpose.msra.mxu0 0.0
    %380 = vmatprep.subr.mxu0 0.0
    %381 = vmatpush1.xpose.msra.mxu0 0.0
    %382 = vmatprep.subr.mxu0 0.0
    %383 = vmatpush1.xpose.msra.mxu0 0.0
    %384 = vmatprep.subr.mxu0 0.0
    %385 = vmatpush1.xpose.msra.mxu0 0.0
    %386 = vmatprep.subr.mxu0 0.0
    %387 = vmatpush1.xpose.msra.mxu0 0.0
    %388 = vmatprep.subr.mxu0 0.0
    %389 = vmatpush1.xpose.msra.mxu0 0.0
    %390 = vmatprep.subr.mxu0 0.0
    %391 = vmatpush1.xpose.msra.mxu0 0.0
    %392 = vmatprep.subr.mxu0 0.0
    %393 = vmatpush1.xpose.msra.mxu0 0.0
    %394 = vmatprep.subr.mxu0 0.0
    %395 = vmatpush1.xpose.msra.mxu0 0.0
    %396 = vmatprep.subr.mxu0 0.0
    %397 = vmatpush1.xpose.msra.mxu0 0.0
    %398 = vmatprep.subr.mxu0 0.0
    %399 = vmatpush1.xpose.msra.mxu0 0.0
    %400 = vmatprep.subr.mxu0 0.0
    %401 = vmatpush1.xpose.msra.mxu0 0.0
    %402 = vmatprep.subr.mxu0 0.0
    %403 = vmatpush1.xpose.msra.mxu0 0.0
    %404 = vmatprep.subr.mxu0 0.0
    %405 = vmatpush1.xpose.msra.mxu0 0.0
    %406 = vmatprep.subr.mxu0 0.0
    %407 = vmatpush1.xpose.msra.mxu0 0.0
    %408 = vmatprep.subr.mxu0 0.0
    %409 = vmatpush1.xpose.msra.mxu0 0.0
    %410 = vmatprep.subr.mxu0 0.0
    %411 = vmatpush1.xpose.msra.mxu0 0.0
    %412 = vmatprep.subr.mxu0 0.0
    %413 = vmatpush1.xpose.msra.mxu0 0.0
    %414 = vmatprep.mubr.f32.mxu0 0.0
    %415 = vmatmul.mubr.f32.gmra.mrb[0].mxu0 %v346
    %v416 = vpop.f32.mrb[0].mxu0
    %v417 = vadd.f32 0.0, %v416
    %v418 = vpop.f32.mrb[0].mxu0
    %419 = vdwg.mxu0
    %v420 = vsel %vm180, %v417, -inf
    %421 = vmax.xlane.f32.xlu0 %v420
    %v422 = vpop.xlane.xlu0 %421
    %v423 = vsub.f32 %v417, %v422
    %v424 = vmul.f32 %v423, 1.442695
    %v425 = vpow.pop %v424
    %v426 = vsel %vm180, %v425, 0.0
    %427 = vadd.xlane.f32.xlu0 %v426
    %v428 = vpop.xlane.xlu0 %427
    %v429 = vrcp.pop %v428
    %v430 = vmul.f32 %v425, %v429
    %431 = vrot.lane.b32.xlu0 %v169, 56
    %v432 = vpop.permute.xlu0 %431
    %v435 = vsel %vm180, %v430, 0
    %437 = vmatprep.subr.mxu0 0.0
    %438 = vmatpush1.msra.mxu0 %v432
    %439 = vmatprep.subr.mxu0 0.0
    %440 = vmatpush1.msra.mxu0 0.0
    %441 = vmatprep.subr.mxu0 0.0
    %442 = vmatpush1.msra.mxu0 0.0
    %443 = vmatprep.subr.mxu0 0.0
    %444 = vmatpush1.msra.mxu0 0.0
    %445 = vmatprep.subr.mxu0 0.0
    %446 = vmatpush1.msra.mxu0 0.0
    %447 = vmatprep.subr.mxu0 0.0
    %448 = vmatpush1.msra.mxu0 0.0
    %449 = vmatprep.subr.mxu0 0.0
    %450 = vmatpush1.msra.mxu0 0.0
    %451 = vmatprep.subr.mxu0 0.0
    %452 = vmatpush1.msra.mxu0 0.0
    %453 = vmatprep.subr.mxu0 0.0
    %454 = vmatpush1.msra.mxu0 0.0
    %455 = vmatprep.subr.mxu0 0.0
    %456 = vmatpush1.msra.mxu0 0.0
    %457 = vmatprep.subr.mxu0 0.0
    %458 = vmatpush1.msra.mxu0 0.0
    %459 = vmatprep.subr.mxu0 0.0
    %460 = vmatpush1.msra.mxu0 0.0
    %461 = vmatprep.subr.mxu0 0.0
    %462 = vmatpush1.msra.mxu0 0.0
    %463 = vmatprep.subr.mxu0 0.0
    %464 = vmatpush1.msra.mxu0 0.0
    %465 = vmatprep.subr.mxu0 0.0
    %466 = vmatpush1.msra.mxu0 0.0
    %467 = vmatprep.subr.mxu0 0.0
    %468 = vmatpush1.msra.mxu0 0.0
    %469 = vmatprep.subr.mxu0 0.0
    %470 = vmatpush1.msra.mxu0 0.0
    %471 = vmatprep.subr.mxu0 0.0
    %472 = vmatpush1.msra.mxu0 0.0
    %473 = vmatprep.subr.mxu0 0.0
    %474 = vmatpush1.msra.mxu0 0.0
    %475 = vmatprep.subr.mxu0 0.0
    %476 = vmatpush1.msra.mxu0 0.0
    %477 = vmatprep.subr.mxu0 0.0
    %478 = vmatpush1.msra.mxu0 0.0
    %479 = vmatprep.subr.mxu0 0.0
    %480 = vmatpush1.msra.mxu0 0.0
    %481 = vmatprep.subr.mxu0 0.0
    %482 = vmatpush1.msra.mxu0 0.0
    %483 = vmatprep.subr.mxu0 0.0
    %484 = vmatpush1.msra.mxu0 0.0
    %485 = vmatprep.subr.mxu0 0.0
    %486 = vmatpush1.msra.mxu0 0.0
    %487 = vmatprep.subr.mxu0 0.0
    %488 = vmatpush1.msra.mxu0 0.0
    %489 = vmatprep.subr.mxu0 0.0
    %490 = vmatpush1.msra.mxu0 0.0
    %491 = vmatprep.subr.mxu0 0.0
    %492 = vmatpush1.msra.mxu0 0.0
    %493 = vmatprep.subr.mxu0 0.0
    %494 = vmatpush1.msra.mxu0 0.0
    %495 = vmatprep.subr.mxu0 0.0
    %496 = vmatpush1.msra.mxu0 0.0
    %497 = vmatprep.subr.mxu0 0.0
    %498 = vmatpush1.msra.mxu0 0.0
    %499 = vmatprep.subr.mxu0 0.0
    %500 = vmatpush1.msra.mxu0 0.0
    %501 = vmatprep.mubr.f32.mxu0 0.0
    %502 = vmatmul.mubr.f32.gmra.mrb[0].mxu0 %v435
    %v503 = vpop.f32.mrb[0].mxu0
    %v504 = vadd.f32 0.0, %v503
    %v505 = vpop.f32.mrb[0].mxu0
    %506 = vdwg.mxu0
    %507 = vrot.lane.b32.xlu0 %v169, 112
    %v508 = vpop.permute.xlu0 %507
    %509 = vrot.lane.b32.xlu0 %v169, 80
    %v510 = vpop.permute.xlu0 %509
    %v511 = vsel %vm180, %v508, 0
    %v513 = vsel %vm180, %v510, 0
    %515 = vmatprep.subr.mxu0 0.0
    %516 = vmatpush1.xpose.msra.mxu0 %v513
    %517 = vmatprep.subr.mxu0 0.0
    %518 = vmatpush1.xpose.msra.mxu0 0.0
    %519 = vmatprep.subr.mxu0 0.0
    %520 = vmatpush1.xpose.msra.mxu0 0.0
    %521 = vmatprep.subr.mxu0 0.0
    %522 = vmatpush1.xpose.msra.mxu0 0.0
    %523 = vmatprep.subr.mxu0 0.0
    %524 = vmatpush1.xpose.msra.mxu0 0.0
    %525 = vmatprep.subr.mxu0 0.0
    %526 = vmatpush1.xpose.msra.mxu0 0.0
    %527 = vmatprep.subr.mxu0 0.0
    %528 = vmatpush1.xpose.msra.mxu0 0.0
    %529 = vmatprep.subr.mxu0 0.0
    %530 = vmatpush1.xpose.msra.mxu0 0.0
    %531 = vmatprep.subr.mxu0 0.0
    %532 = vmatpush1.xpose.msra.mxu0 0.0
    %533 = vmatprep.subr.mxu0 0.0
    %534 = vmatpush1.xpose.msra.mxu0 0.0
    %535 = vmatprep.subr.mxu0 0.0
    %536 = vmatpush1.xpose.msra.mxu0 0.0
    %537 = vmatprep.subr.mxu0 0.0
    %538 = vmatpush1.xpose.msra.mxu0 0.0
    %539 = vmatprep.subr.mxu0 0.0
    %540 = vmatpush1.xpose.msra.mxu0 0.0
    %541 = vmatprep.subr.mxu0 0.0
    %542 = vmatpush1.xpose.msra.mxu0 0.0
    %543 = vmatprep.subr.mxu0 0.0
    %544 = vmatpush1.xpose.msra.mxu0 0.0
    %545 = vmatprep.subr.mxu0 0.0
    %546 = vmatpush1.xpose.msra.mxu0 0.0
    %547 = vmatprep.subr.mxu0 0.0
    %548 = vmatpush1.xpose.msra.mxu0 0.0
    %549 = vmatprep.subr.mxu0 0.0
    %550 = vmatpush1.xpose.msra.mxu0 0.0
    %551 = vmatprep.subr.mxu0 0.0
    %552 = vmatpush1.xpose.msra.mxu0 0.0
    %553 = vmatprep.subr.mxu0 0.0
    %554 = vmatpush1.xpose.msra.mxu0 0.0
    %555 = vmatprep.subr.mxu0 0.0
    %556 = vmatpush1.xpose.msra.mxu0 0.0
    %557 = vmatprep.subr.mxu0 0.0
    %558 = vmatpush1.xpose.msra.mxu0 0.0
    %559 = vmatprep.subr.mxu0 0.0
    %560 = vmatpush1.xpose.msra.mxu0 0.0
    %561 = vmatprep.subr.mxu0 0.0
    %562 = vmatpush1.xpose.msra.mxu0 0.0
    %563 = vmatprep.subr.mxu0 0.0
    %564 = vmatpush1.xpose.msra.mxu0 0.0
    %565 = vmatprep.subr.mxu0 0.0
    %566 = vmatpush1.xpose.msra.mxu0 0.0
    %567 = vmatprep.subr.mxu0 0.0
    %568 = vmatpush1.xpose.msra.mxu0 0.0
    %569 = vmatprep.subr.mxu0 0.0
    %570 = vmatpush1.xpose.msra.mxu0 0.0
    %571 = vmatprep.subr.mxu0 0.0
    %572 = vmatpush1.xpose.msra.mxu0 0.0
    %573 = vmatprep.subr.mxu0 0.0
    %574 = vmatpush1.xpose.msra.mxu0 0.0
    %575 = vmatprep.subr.mxu0 0.0
    %576 = vmatpush1.xpose.msra.mxu0 0.0
    %577 = vmatprep.subr.mxu0 0.0
    %578 = vmatpush1.xpose.msra.mxu0 0.0
    %579 = vmatprep.mubr.f32.mxu0 0.0
    %580 = vmatmul.mubr.f32.gmra.mrb[0].mxu0 %v511
    %v581 = vpop.f32.mrb[0].mxu0
    %v582 = vadd.f32 0.0, %v581
    %v583 = vpop.f32.mrb[0].mxu0
    %584 = vdwg.mxu0
    %v585 = vsel %vm180, %v582, -inf
    %586 = vmax.xlane.f32.xlu0 %v585
    %v587 = vpop.xlane.xlu0 %586
    %v588 = vsub.f32 %v582, %v587
    %v589 = vmul.f32 %v588, 1.442695
    %v590 = vpow.pop %v589
    %v591 = vsel %vm180, %v590, 0.0
    %592 = vadd.xlane.f32.xlu0 %v591
    %v593 = vpop.xlane.xlu0 %592
    %v594 = vrcp.pop %v593
    %v595 = vmul.f32 %v590, %v594
    %596 = vrot.lane.b32.xlu0 %v169, 48
    %v597 = vpop.permute.xlu0 %596
    %v600 = vsel %vm180, %v595, 0
    %602 = vmatprep.subr.mxu0 0.0
    %603 = vmatpush1.msra.mxu0 %v597
    %604 = vmatprep.subr.mxu0 0.0
    %605 = vmatpush1.msra.mxu0 0.0
    %606 = vmatprep.subr.mxu0 0.0
    %607 = vmatpush1.msra.mxu0 0.0
    %608 = vmatprep.subr.mxu0 0.0
    %609 = vmatpush1.msra.mxu0 0.0
    %610 = vmatprep.subr.mxu0 0.0
    %611 = vmatpush1.msra.mxu0 0.0
    %612 = vmatprep.subr.mxu0 0.0
    %613 = vmatpush1.msra.mxu0 0.0
    %614 = vmatprep.subr.mxu0 0.0
    %615 = vmatpush1.msra.mxu0 0.0
    %616 = vmatprep.subr.mxu0 0.0
    %617 = vmatpush1.msra.mxu0 0.0
    %618 = vmatprep.subr.mxu0 0.0
    %619 = vmatpush1.msra.mxu0 0.0
    %620 = vmatprep.subr.mxu0 0.0
    %621 = vmatpush1.msra.mxu0 0.0
    %622 = vmatprep.subr.mxu0 0.0
    %623 = vmatpush1.msra.mxu0 0.0
    %624 = vmatprep.subr.mxu0 0.0
    %625 = vmatpush1.msra.mxu0 0.0
    %626 = vmatprep.subr.mxu0 0.0
    %627 = vmatpush1.msra.mxu0 0.0
    %628 = vmatprep.subr.mxu0 0.0
    %629 = vmatpush1.msra.mxu0 0.0
    %630 = vmatprep.subr.mxu0 0.0
    %631 = vmatpush1.msra.mxu0 0.0
    %632 = vmatprep.subr.mxu0 0.0
    %633 = vmatpush1.msra.mxu0 0.0
    %634 = vmatprep.subr.mxu0 0.0
    %635 = vmatpush1.msra.mxu0 0.0
    %636 = vmatprep.subr.mxu0 0.0
    %637 = vmatpush1.msra.mxu0 0.0
    %638 = vmatprep.subr.mxu0 0.0
    %639 = vmatpush1.msra.mxu0 0.0
    %640 = vmatprep.subr.mxu0 0.0
    %641 = vmatpush1.msra.mxu0 0.0
    %642 = vmatprep.subr.mxu0 0.0
    %643 = vmatpush1.msra.mxu0 0.0
    %644 = vmatprep.subr.mxu0 0.0
    %645 = vmatpush1.msra.mxu0 0.0
    %646 = vmatprep.subr.mxu0 0.0
    %647 = vmatpush1.msra.mxu0 0.0
    %648 = vmatprep.subr.mxu0 0.0
    %649 = vmatpush1.msra.mxu0 0.0
    %650 = vmatprep.subr.mxu0 0.0
    %651 = vmatpush1.msra.mxu0 0.0
    %652 = vmatprep.subr.mxu0 0.0
    %653 = vmatpush1.msra.mxu0 0.0
    %654 = vmatprep.subr.mxu0 0.0
    %655 = vmatpush1.msra.mxu0 0.0
    %656 = vmatprep.subr.mxu0 0.0
    %657 = vmatpush1.msra.mxu0 0.0
    %658 = vmatprep.subr.mxu0 0.0
    %659 = vmatpush1.msra.mxu0 0.0
    %660 = vmatprep.subr.mxu0 0.0
    %661 = vmatpush1.msra.mxu0 0.0
    %662 = vmatprep.subr.mxu0 0.0
    %663 = vmatpush1.msra.mxu0 0.0
    %664 = vmatprep.subr.mxu0 0.0
    %665 = vmatpush1.msra.mxu0 0.0
    %666 = vmatprep.mubr.f32.mxu0 0.0
    %667 = vmatmul.mubr.f32.gmra.mrb[0].mxu0 %v600
    %v668 = vpop.f32.mrb[0].mxu0
    %v669 = vadd.f32 0.0, %v668
    %v670 = vpop.f32.mrb[0].mxu0
    %671 = vdwg.mxu0
    %672 = vrot.lane.b32.xlu0 %v169, 104
    %v673 = vpop.permute.xlu0 %672
    %674 = vrot.lane.b32.xlu0 %v169, 72
    %v675 = vpop.permute.xlu0 %674
    %v676 = vsel %vm180, %v673, 0
    %v678 = vsel %vm180, %v675, 0
    %680 = vmatprep.subr.mxu0 0.0
    %681 = vmatpush1.xpose.msra.mxu0 %v678
    %682 = vmatprep.subr.mxu0 0.0
    %683 = vmatpush1.xpose.msra.mxu0 0.0
    %684 = vmatprep.subr.mxu0 0.0
    %685 = vmatpush1.xpose.msra.mxu0 0.0
    %686 = vmatprep.subr.mxu0 0.0
    %687 = vmatpush1.xpose.msra.mxu0 0.0
    %688 = vmatprep.subr.mxu0 0.0
    %689 = vmatpush1.xpose.msra.mxu0 0.0
    %690 = vmatprep.subr.mxu0 0.0
    %691 = vmatpush1.xpose.msra.mxu0 0.0
    %692 = vmatprep.subr.mxu0 0.0
    %693 = vmatpush1.xpose.msra.mxu0 0.0
    %694 = vmatprep.subr.mxu0 0.0
    %695 = vmatpush1.xpose.msra.mxu0 0.0
    %696 = vmatprep.subr.mxu0 0.0
    %697 = vmatpush1.xpose.msra.mxu0 0.0
    %698 = vmatprep.subr.mxu0 0.0
    %699 = vmatpush1.xpose.msra.mxu0 0.0
    %700 = vmatprep.subr.mxu0 0.0
    %701 = vmatpush1.xpose.msra.mxu0 0.0
    %702 = vmatprep.subr.mxu0 0.0
    %703 = vmatpush1.xpose.msra.mxu0 0.0
    %704 = vmatprep.subr.mxu0 0.0
    %705 = vmatpush1.xpose.msra.mxu0 0.0
    %706 = vmatprep.subr.mxu0 0.0
    %707 = vmatpush1.xpose.msra.mxu0 0.0
    %708 = vmatprep.subr.mxu0 0.0
    %709 = vmatpush1.xpose.msra.mxu0 0.0
    %710 = vmatprep.subr.mxu0 0.0
    %711 = vmatpush1.xpose.msra.mxu0 0.0
    %712 = vmatprep.subr.mxu0 0.0
    %713 = vmatpush1.xpose.msra.mxu0 0.0
    %714 = vmatprep.subr.mxu0 0.0
    %715 = vmatpush1.xpose.msra.mxu0 0.0
    %716 = vmatprep.subr.mxu0 0.0
    %717 = vmatpush1.xpose.msra.mxu0 0.0
    %718 = vmatprep.subr.mxu0 0.0
    %719 = vmatpush1.xpose.msra.mxu0 0.0
    %720 = vmatprep.subr.mxu0 0.0
    %721 = vmatpush1.xpose.msra.mxu0 0.0
    %722 = vmatprep.subr.mxu0 0.0
    %723 = vmatpush1.xpose.msra.mxu0 0.0
    %724 = vmatprep.subr.mxu0 0.0
    %725 = vmatpush1.xpose.msra.mxu0 0.0
    %726 = vmatprep.subr.mxu0 0.0
    %727 = vmatpush1.xpose.msra.mxu0 0.0
    %728 = vmatprep.subr.mxu0 0.0
    %729 = vmatpush1.xpose.msra.mxu0 0.0
    %730 = vmatprep.subr.mxu0 0.0
    %731 = vmatpush1.xpose.msra.mxu0 0.0
    %732 = vmatprep.subr.mxu0 0.0
    %733 = vmatpush1.xpose.msra.mxu0 0.0
    %734 = vmatprep.subr.mxu0 0.0
    %735 = vmatpush1.xpose.msra.mxu0 0.0
    %736 = vmatprep.subr.mxu0 0.0
    %737 = vmatpush1.xpose.msra.mxu0 0.0
    %738 = vmatprep.subr.mxu0 0.0
    %739 = vmatpush1.xpose.msra.mxu0 0.0
    %740 = vmatprep.subr.mxu0 0.0
    %741 = vmatpush1.xpose.msra.mxu0 0.0
    %742 = vmatprep.subr.mxu0 0.0
    %743 = vmatpush1.xpose.msra.mxu0 0.0
    %744 = vmatprep.mubr.f32.mxu0 0.0
    %745 = vmatmul.mubr.f32.gmra.mrb[0].mxu0 %v676
    %v746 = vpop.f32.mrb[0].mxu0
    %v747 = vadd.f32 0.0, %v746
    %v748 = vpop.f32.mrb[0].mxu0
    %749 = vdwg.mxu0
    %v750 = vsel %vm180, %v747, -inf
    %751 = vmax.xlane.f32.xlu0 %v750
    %v752 = vpop.xlane.xlu0 %751
    %v753 = vsub.f32 %v747, %v752
    %v754 = vmul.f32 %v753, 1.442695
    %v755 = vpow.pop %v754
    %v756 = vsel %vm180, %v755, 0.0
    %757 = vadd.xlane.f32.xlu0 %v756
    %v758 = vpop.xlane.xlu0 %757
    %v759 = vrcp.pop %v758
    %v760 = vmul.f32 %v755, %v759
    %761 = vrot.lane.b32.xlu0 %v169, 40
    %v762 = vpop.permute.xlu0 %761
    %v765 = vsel %vm180, %v760, 0
    %767 = vmatprep.subr.mxu0 0.0
    %768 = vmatpush1.msra.mxu0 %v762
    %769 = vmatprep.subr.mxu0 0.0
    %770 = vmatpush1.msra.mxu0 0.0
    %771 = vmatprep.subr.mxu0 0.0
    %772 = vmatpush1.msra.mxu0 0.0
    %773 = vmatprep.subr.mxu0 0.0
    %774 = vmatpush1.msra.mxu0 0.0
    %775 = vmatprep.subr.mxu0 0.0
    %776 = vmatpush1.msra.mxu0 0.0
    %777 = vmatprep.subr.mxu0 0.0
    %778 = vmatpush1.msra.mxu0 0.0
    %779 = vmatprep.subr.mxu0 0.0
    %780 = vmatpush1.msra.mxu0 0.0
    %781 = vmatprep.subr.mxu0 0.0
    %782 = vmatpush1.msra.mxu0 0.0
    %783 = vmatprep.subr.mxu0 0.0
    %784 = vmatpush1.msra.mxu0 0.0
    %785 = vmatprep.subr.mxu0 0.0
    %786 = vmatpush1.msra.mxu0 0.0
    %787 = vmatprep.subr.mxu0 0.0
    %788 = vmatpush1.msra.mxu0 0.0
    %789 = vmatprep.subr.mxu0 0.0
    %790 = vmatpush1.msra.mxu0 0.0
    %791 = vmatprep.subr.mxu0 0.0
    %792 = vmatpush1.msra.mxu0 0.0
    %793 = vmatprep.subr.mxu0 0.0
    %794 = vmatpush1.msra.mxu0 0.0
    %795 = vmatprep.subr.mxu0 0.0
    %796 = vmatpush1.msra.mxu0 0.0
    %797 = vmatprep.subr.mxu0 0.0
    %798 = vmatpush1.msra.mxu0 0.0
    %799 = vmatprep.subr.mxu0 0.0
    %800 = vmatpush1.msra.mxu0 0.0
    %801 = vmatprep.subr.mxu0 0.0
    %802 = vmatpush1.msra.mxu0 0.0
    %803 = vmatprep.subr.mxu0 0.0
    %804 = vmatpush1.msra.mxu0 0.0
    %805 = vmatprep.subr.mxu0 0.0
    %806 = vmatpush1.msra.mxu0 0.0
    %807 = vmatprep.subr.mxu0 0.0
    %808 = vmatpush1.msra.mxu0 0.0
    %809 = vmatprep.subr.mxu0 0.0
    %810 = vmatpush1.msra.mxu0 0.0
    %811 = vmatprep.subr.mxu0 0.0
    %812 = vmatpush1.msra.mxu0 0.0
    %813 = vmatprep.subr.mxu0 0.0
    %814 = vmatpush1.msra.mxu0 0.0
    %815 = vmatprep.subr.mxu0 0.0
    %816 = vmatpush1.msra.mxu0 0.0
    %817 = vmatprep.subr.mxu0 0.0
    %818 = vmatpush1.msra.mxu0 0.0
    %819 = vmatprep.subr.mxu0 0.0
    %820 = vmatpush1.msra.mxu0 0.0
    %821 = vmatprep.subr.mxu0 0.0
    %822 = vmatpush1.msra.mxu0 0.0
    %823 = vmatprep.subr.mxu0 0.0
    %824 = vmatpush1.msra.mxu0 0.0
    %825 = vmatprep.subr.mxu0 0.0
    %826 = vmatpush1.msra.mxu0 0.0
    %827 = vmatprep.subr.mxu0 0.0
    %828 = vmatpush1.msra.mxu0 0.0
    %829 = vmatprep.subr.mxu0 0.0
    %830 = vmatpush1.msra.mxu0 0.0
    %831 = vmatprep.mubr.f32.mxu0 0.0
    %832 = vmatmul.mubr.f32.gmra.mrb[0].mxu0 %v765
    %v833 = vpop.f32.mrb[0].mxu0
    %v834 = vadd.f32 0.0, %v833
    %v835 = vpop.f32.mrb[0].mxu0
    %836 = vdwg.mxu0
    %838 = vrot.lane.b32.xlu0 %v504, 8
    %v839 = vpop.permute.xlu0 %838
    %842 = vrot.lane.b32.xlu0 %v669, 16
    %v843 = vpop.permute.xlu0 %842
    %846 = vrot.lane.b32.xlu0 %v834, 24
    %v847 = vpop.permute.xlu0 %846
    %v849 = vsel %vm180, %v339, %v839
    %vm850 = vcmask 130048
    %v851 = vsel %vm850, %v849, %v843
    %vm852 = vcmask 195584
    %v853 = vsel %vm852, %v851, %v847
    %855 = vrot.lane.b32.xlu0 %v174, 96
    %v856 = vpop.permute.xlu0 %855
    %v857 = vsel %vm180, %v174, 0
    %v859 = vsel %vm180, %v856, 0
    %861 = vmatprep.subr.mxu0 0.0
    %862 = vmatpush1.xpose.msra.mxu0 %v859
    %863 = vmatprep.subr.mxu0 0.0
    %864 = vmatpush1.xpose.msra.mxu0 0.0
    %865 = vmatprep.subr.mxu0 0.0
    %866 = vmatpush1.xpose.msra.mxu0 0.0
    %867 = vmatprep.subr.mxu0 0.0
    %868 = vmatpush1.xpose.msra.mxu0 0.0
    %869 = vmatprep.subr.mxu0 0.0
    %870 = vmatpush1.xpose.msra.mxu0 0.0
    %871 = vmatprep.subr.mxu0 0.0
    %872 = vmatpush1.xpose.msra.mxu0 0.0
    %873 = vmatprep.subr.mxu0 0.0
    %874 = vmatpush1.xpose.msra.mxu0 0.0
    %875 = vmatprep.subr.mxu0 0.0
    %876 = vmatpush1.xpose.msra.mxu0 0.0
    %877 = vmatprep.subr.mxu0 0.0
    %878 = vmatpush1.xpose.msra.mxu0 0.0
    %879 = vmatprep.subr.mxu0 0.0
    %880 = vmatpush1.xpose.msra.mxu0 0.0
    %881 = vmatprep.subr.mxu0 0.0
    %882 = vmatpush1.xpose.msra.mxu0 0.0
    %883 = vmatprep.subr.mxu0 0.0
    %884 = vmatpush1.xpose.msra.mxu0 0.0
    %885 = vmatprep.subr.mxu0 0.0
    %886 = vmatpush1.xpose.msra.mxu0 0.0
    %887 = vmatprep.subr.mxu0 0.0
    %888 = vmatpush1.xpose.msra.mxu0 0.0
    %889 = vmatprep.subr.mxu0 0.0
    %890 = vmatpush1.xpose.msra.mxu0 0.0
    %891 = vmatprep.subr.mxu0 0.0
    %892 = vmatpush1.xpose.msra.mxu0 0.0
    %893 = vmatprep.subr.mxu0 0.0
    %894 = vmatpush1.xpose.msra.mxu0 0.0
    %895 = vmatprep.subr.mxu0 0.0
    %896 = vmatpush1.xpose.msra.mxu0 0.0
    %897 = vmatprep.subr.mxu0 0.0
    %898 = vmatpush1.xpose.msra.mxu0 0.0
    %899 = vmatprep.subr.mxu0 0.0
    %900 = vmatpush1.xpose.msra.mxu0 0.0
    %901 = vmatprep.subr.mxu0 0.0
    %902 = vmatpush1.xpose.msra.mxu0 0.0
    %903 = vmatprep.subr.mxu0 0.0
    %904 = vmatpush1.xpose.msra.mxu0 0.0
    %905 = vmatprep.subr.mxu0 0.0
    %906 = vmatpush1.xpose.msra.mxu0 0.0
    %907 = vmatprep.subr.mxu0 0.0
    %908 = vmatpush1.xpose.msra.mxu0 0.0
    %909 = vmatprep.subr.mxu0 0.0
    %910 = vmatpush1.xpose.msra.mxu0 0.0
    %911 = vmatprep.subr.mxu0 0.0
    %912 = vmatpush1.xpose.msra.mxu0 0.0
    %913 = vmatprep.subr.mxu0 0.0
    %914 = vmatpush1.xpose.msra.mxu0 0.0
    %915 = vmatprep.subr.mxu0 0.0
    %916 = vmatpush1.xpose.msra.mxu0 0.0
    %917 = vmatprep.subr.mxu0 0.0
    %918 = vmatpush1.xpose.msra.mxu0 0.0
    %919 = vmatprep.subr.mxu0 0.0
    %920 = vmatpush1.xpose.msra.mxu0 0.0
    %921 = vmatprep.subr.mxu0 0.0
    %922 = vmatpush1.xpose.msra.mxu0 0.0
    %923 = vmatprep.subr.mxu0 0.0
    %924 = vmatpush1.xpose.msra.mxu0 0.0
    %925 = vmatprep.mubr.f32.mxu0 0.0
    %926 = vmatmul.mubr.f32.gmra.mrb[0].mxu0 %v857
    %v927 = vpop.f32.mrb[0].mxu0
    %v928 = vadd.f32 0.0, %v927
    %v929 = vpop.f32.mrb[0].mxu0
    %930 = vdwg.mxu0
    %v931 = vsel %vm180, %v928, -inf
    %932 = vmax.xlane.f32.xlu0 %v931
    %v933 = vpop.xlane.xlu0 %932
    %v934 = vsub.f32 %v928, %v933
    %v935 = vmul.f32 %v934, 1.442695
    %v936 = vpow.pop %v935
    %v937 = vsel %vm180, %v936, 0.0
    %938 = vadd.xlane.f32.xlu0 %v937
    %v939 = vpop.xlane.xlu0 %938
    %v940 = vrcp.pop %v939
    %v941 = vmul.f32 %v936, %v940
    %942 = vrot.lane.b32.xlu0 %v174, 64
    %v943 = vpop.permute.xlu0 %942
    %v946 = vsel %vm180, %v941, 0
    %948 = vmatprep.subr.mxu0 0.0
    %949 = vmatpush1.msra.mxu0 %v943
    %950 = vmatprep.subr.mxu0 0.0
    %951 = vmatpush1.msra.mxu0 0.0
    %952 = vmatprep.subr.mxu0 0.0
    %953 = vmatpush1.msra.mxu0 0.0
    %954 = vmatprep.subr.mxu0 0.0
    %955 = vmatpush1.msra.mxu0 0.0
    %956 = vmatprep.subr.mxu0 0.0
    %957 = vmatpush1.msra.mxu0 0.0
    %958 = vmatprep.subr.mxu0 0.0
    %959 = vmatpush1.msra.mxu0 0.0
    %960 = vmatprep.subr.mxu0 0.0
    %961 = vmatpush1.msra.mxu0 0.0
    %962 = vmatprep.subr.mxu0 0.0
    %963 = vmatpush1.msra.mxu0 0.0
    %964 = vmatprep.subr.mxu0 0.0
    %965 = vmatpush1.msra.mxu0 0.0
    %966 = vmatprep.subr.mxu0 0.0
    %967 = vmatpush1.msra.mxu0 0.0
    %968 = vmatprep.subr.mxu0 0.0
    %969 = vmatpush1.msra.mxu0 0.0
    %970 = vmatprep.subr.mxu0 0.0
    %971 = vmatpush1.msra.mxu0 0.0
    %972 = vmatprep.subr.mxu0 0.0
    %973 = vmatpush1.msra.mxu0 0.0
    %974 = vmatprep.subr.mxu0 0.0
    %975 = vmatpush1.msra.mxu0 0.0
    %976 = vmatprep.subr.mxu0 0.0
    %977 = vmatpush1.msra.mxu0 0.0
    %978 = vmatprep.subr.mxu0 0.0
    %979 = vmatpush1.msra.mxu0 0.0
    %980 = vmatprep.subr.mxu0 0.0
    %981 = vmatpush1.msra.mxu0 0.0
    %982 = vmatprep.subr.mxu0 0.0
    %983 = vmatpush1.msra.mxu0 0.0
    %984 = vmatprep.subr.mxu0 0.0
    %985 = vmatpush1.msra.mxu0 0.0
    %986 = vmatprep.subr.mxu0 0.0
    %987 = vmatpush1.msra.mxu0 0.0
    %988 = vmatprep.subr.mxu0 0.0
    %989 = vmatpush1.msra.mxu0 0.0
    %990 = vmatprep.subr.mxu0 0.0
    %991 = vmatpush1.msra.mxu0 0.0
    %992 = vmatprep.subr.mxu0 0.0
    %993 = vmatpush1.msra.mxu0 0.0
    %994 = vmatprep.subr.mxu0 0.0
    %995 = vmatpush1.msra.mxu0 0.0
    %996 = vmatprep.subr.mxu0 0.0
    %997 = vmatpush1.msra.mxu0 0.0
    %998 = vmatprep.subr.mxu0 0.0
    %999 = vmatpush1.msra.mxu0 0.0
    %1000 = vmatprep.subr.mxu0 0.0
    %1001 = vmatpush1.msra.mxu0 0.0
    %1002 = vmatprep.subr.mxu0 0.0
    %1003 = vmatpush1.msra.mxu0 0.0
    %1004 = vmatprep.subr.mxu0 0.0
    %1005 = vmatpush1.msra.mxu0 0.0
    %1006 = vmatprep.subr.mxu0 0.0
    %1007 = vmatpush1.msra.mxu0 0.0
    %1008 = vmatprep.subr.mxu0 0.0
    %1009 = vmatpush1.msra.mxu0 0.0
    %1010 = vmatprep.subr.mxu0 0.0
    %1011 = vmatpush1.msra.mxu0 0.0
    %1012 = vmatprep.mubr.f32.mxu0 0.0
    %1013 = vmatmul.mubr.f32.gmra.mrb[0].mxu0 %v946
    %v1014 = vpop.f32.mrb[0].mxu0
    %v1015 = vadd.f32 0.0, %v1014
    %v1016 = vpop.f32.mrb[0].mxu0
    %1017 = vdwg.mxu0
    %1018 = vrot.lane.b32.xlu0 %v174, 120
    %v1019 = vpop.permute.xlu0 %1018
    %1020 = vrot.lane.b32.xlu0 %v174, 88
    %v1021 = vpop.permute.xlu0 %1020
    %v1022 = vsel %vm180, %v1019, 0
    %v1024 = vsel %vm180, %v1021, 0
    %1026 = vmatprep.subr.mxu0 0.0
    %1027 = vmatpush1.xpose.msra.mxu0 %v1024
    %1028 = vmatprep.subr.mxu0 0.0
    %1029 = vmatpush1.xpose.msra.mxu0 0.0
    %1030 = vmatprep.subr.mxu0 0.0
    %1031 = vmatpush1.xpose.msra.mxu0 0.0
    %1032 = vmatprep.subr.mxu0 0.0
    %1033 = vmatpush1.xpose.msra.mxu0 0.0
    %1034 = vmatprep.subr.mxu0 0.0
    %1035 = vmatpush1.xpose.msra.mxu0 0.0
    %1036 = vmatprep.subr.mxu0 0.0
    %1037 = vmatpush1.xpose.msra.mxu0 0.0
    %1038 = vmatprep.subr.mxu0 0.0
    %1039 = vmatpush1.xpose.msra.mxu0 0.0
    %1040 = vmatprep.subr.mxu0 0.0
    %1041 = vmatpush1.xpose.msra.mxu0 0.0
    %1042 = vmatprep.subr.mxu0 0.0
    %1043 = vmatpush1.xpose.msra.mxu0 0.0
    %1044 = vmatprep.subr.mxu0 0.0
    %1045 = vmatpush1.xpose.msra.mxu0 0.0
    %1046 = vmatprep.subr.mxu0 0.0
    %1047 = vmatpush1.xpose.msra.mxu0 0.0
    %1048 = vmatprep.subr.mxu0 0.0
    %1049 = vmatpush1.xpose.msra.mxu0 0.0
    %1050 = vmatprep.subr.mxu0 0.0
    %1051 = vmatpush1.xpose.msra.mxu0 0.0
    %1052 = vmatprep.subr.mxu0 0.0
    %1053 = vmatpush1.xpose.msra.mxu0 0.0
    %1054 = vmatprep.subr.mxu0 0.0
    %1055 = vmatpush1.xpose.msra.mxu0 0.0
    %1056 = vmatprep.subr.mxu0 0.0
    %1057 = vmatpush1.xpose.msra.mxu0 0.0
    %1058 = vmatprep.subr.mxu0 0.0
    %1059 = vmatpush1.xpose.msra.mxu0 0.0
    %1060 = vmatprep.subr.mxu0 0.0
    %1061 = vmatpush1.xpose.msra.mxu0 0.0
    %1062 = vmatprep.subr.mxu0 0.0
    %1063 = vmatpush1.xpose.msra.mxu0 0.0
    %1064 = vmatprep.subr.mxu0 0.0
    %1065 = vmatpush1.xpose.msra.mxu0 0.0
    %1066 = vmatprep.subr.mxu0 0.0
    %1067 = vmatpush1.xpose.msra.mxu0 0.0
    %1068 = vmatprep.subr.mxu0 0.0
    %1069 = vmatpush1.xpose.msra.mxu0 0.0
    %1070 = vmatprep.subr.mxu0 0.0
    %1071 = vmatpush1.xpose.msra.mxu0 0.0
    %1072 = vmatprep.subr.mxu0 0.0
    %1073 = vmatpush1.xpose.msra.mxu0 0.0
    %1074 = vmatprep.subr.mxu0 0.0
    %1075 = vmatpush1.xpose.msra.mxu0 0.0
    %1076 = vmatprep.subr.mxu0 0.0
    %1077 = vmatpush1.xpose.msra.mxu0 0.0
    %1078 = vmatprep.subr.mxu0 0.0
    %1079 = vmatpush1.xpose.msra.mxu0 0.0
    %1080 = vmatprep.subr.mxu0 0.0
    %1081 = vmatpush1.xpose.msra.mxu0 0.0
    %1082 = vmatprep.subr.mxu0 0.0
    %1083 = vmatpush1.xpose.msra.mxu0 0.0
    %1084 = vmatprep.subr.mxu0 0.0
    %1085 = vmatpush1.xpose.msra.mxu0 0.0
    %1086 = vmatprep.subr.mxu0 0.0
    %1087 = vmatpush1.xpose.msra.mxu0 0.0
    %1088 = vmatprep.subr.mxu0 0.0
    %1089 = vmatpush1.xpose.msra.mxu0 0.0
    %1090 = vmatprep.mubr.f32.mxu0 0.0
    %1091 = vmatmul.mubr.f32.gmra.mrb[0].mxu0 %v1022
    %v1092 = vpop.f32.mrb[0].mxu0
    %v1093 = vadd.f32 0.0, %v1092
    %v1094 = vpop.f32.mrb[0].mxu0
    %1095 = vdwg.mxu0
    %v1096 = vsel %vm180, %v1093, -inf
    %1097 = vmax.xlane.f32.xlu0 %v1096
    %v1098 = vpop.xlane.xlu0 %1097
    %v1099 = vsub.f32 %v1093, %v1098
    %v1100 = vmul.f32 %v1099, 1.442695
    %v1101 = vpow.pop %v1100
    %v1102 = vsel %vm180, %v1101, 0.0
    %1103 = vadd.xlane.f32.xlu0 %v1102
    %v1104 = vpop.xlane.xlu0 %1103
    %v1105 = vrcp.pop %v1104
    %v1106 = vmul.f32 %v1101, %v1105
    %1107 = vrot.lane.b32.xlu0 %v174, 56
    %v1108 = vpop.permute.xlu0 %1107
    %v1111 = vsel %vm180, %v1106, 0
    %1113 = vmatprep.subr.mxu0 0.0
    %1114 = vmatpush1.msra.mxu0 %v1108
    %1115 = vmatprep.subr.mxu0 0.0
    %1116 = vmatpush1.msra.mxu0 0.0
    %1117 = vmatprep.subr.mxu0 0.0
    %1118 = vmatpush1.msra.mxu0 0.0
    %1119 = vmatprep.subr.mxu0 0.0
    %1120 = vmatpush1.msra.mxu0 0.0
    %1121 = vmatprep.subr.mxu0 0.0
    %1122 = vmatpush1.msra.mxu0 0.0
    %1123 = vmatprep.subr.mxu0 0.0
    %1124 = vmatpush1.msra.mxu0 0.0
    %1125 = vmatprep.subr.mxu0 0.0
    %1126 = vmatpush1.msra.mxu0 0.0
    %1127 = vmatprep.subr.mxu0 0.0
    %1128 = vmatpush1.msra.mxu0 0.0
    %1129 = vmatprep.subr.mxu0 0.0
    %1130 = vmatpush1.msra.mxu0 0.0
    %1131 = vmatprep.subr.mxu0 0.0
    %1132 = vmatpush1.msra.mxu0 0.0
    %1133 = vmatprep.subr.mxu0 0.0
    %1134 = vmatpush1.msra.mxu0 0.0
    %1135 = vmatprep.subr.mxu0 0.0
    %1136 = vmatpush1.msra.mxu0 0.0
    %1137 = vmatprep.subr.mxu0 0.0
    %1138 = vmatpush1.msra.mxu0 0.0
    %1139 = vmatprep.subr.mxu0 0.0
    %1140 = vmatpush1.msra.mxu0 0.0
    %1141 = vmatprep.subr.mxu0 0.0
    %1142 = vmatpush1.msra.mxu0 0.0
    %1143 = vmatprep.subr.mxu0 0.0
    %1144 = vmatpush1.msra.mxu0 0.0
    %1145 = vmatprep.subr.mxu0 0.0
    %1146 = vmatpush1.msra.mxu0 0.0
    %1147 = vmatprep.subr.mxu0 0.0
    %1148 = vmatpush1.msra.mxu0 0.0
    %1149 = vmatprep.subr.mxu0 0.0
    %1150 = vmatpush1.msra.mxu0 0.0
    %1151 = vmatprep.subr.mxu0 0.0
    %1152 = vmatpush1.msra.mxu0 0.0
    %1153 = vmatprep.subr.mxu0 0.0
    %1154 = vmatpush1.msra.mxu0 0.0
    %1155 = vmatprep.subr.mxu0 0.0
    %1156 = vmatpush1.msra.mxu0 0.0
    %1157 = vmatprep.subr.mxu0 0.0
    %1158 = vmatpush1.msra.mxu0 0.0
    %1159 = vmatprep.subr.mxu0 0.0
    %1160 = vmatpush1.msra.mxu0 0.0
    %1161 = vmatprep.subr.mxu0 0.0
    %1162 = vmatpush1.msra.mxu0 0.0
    %1163 = vmatprep.subr.mxu0 0.0
    %1164 = vmatpush1.msra.mxu0 0.0
    %1165 = vmatprep.subr.mxu0 0.0
    %1166 = vmatpush1.msra.mxu0 0.0
    %1167 = vmatprep.subr.mxu0 0.0
    %1168 = vmatpush1.msra.mxu0 0.0
    %1169 = vmatprep.subr.mxu0 0.0
    %1170 = vmatpush1.msra.mxu0 0.0
    %1171 = vmatprep.subr.mxu0 0.0
    %1172 = vmatpush1.msra.mxu0 0.0
    %1173 = vmatprep.subr.mxu0 0.0
    %1174 = vmatpush1.msra.mxu0 0.0
    %1175 = vmatprep.subr.mxu0 0.0
    %1176 = vmatpush1.msra.mxu0 0.0
    %1177 = vmatprep.mubr.f32.mxu0 0.0
    %1178 = vmatmul.mubr.f32.gmra.mrb[0].mxu0 %v1111
    %v1179 = vpop.f32.mrb[0].mxu0
    %v1180 = vadd.f32 0.0, %v1179
    %v1181 = vpop.f32.mrb[0].mxu0
    %1182 = vdwg.mxu0
    %1183 = vrot.lane.b32.xlu0 %v174, 112
    %v1184 = vpop.permute.xlu0 %1183
    %1185 = vrot.lane.b32.xlu0 %v174, 80
    %v1186 = vpop.permute.xlu0 %1185
    %v1187 = vsel %vm180, %v1184, 0
    %v1189 = vsel %vm180, %v1186, 0
    %1191 = vmatprep.subr.mxu0 0.0
    %1192 = vmatpush1.xpose.msra.mxu0 %v1189
    %1193 = vmatprep.subr.mxu0 0.0
    %1194 = vmatpush1.xpose.msra.mxu0 0.0
    %1195 = vmatprep.subr.mxu0 0.0
    %1196 = vmatpush1.xpose.msra.mxu0 0.0
    %1197 = vmatprep.subr.mxu0 0.0
    %1198 = vmatpush1.xpose.msra.mxu0 0.0
    %1199 = vmatprep.subr.mxu0 0.0
    %1200 = vmatpush1.xpose.msra.mxu0 0.0
    %1201 = vmatprep.subr.mxu0 0.0
    %1202 = vmatpush1.xpose.msra.mxu0 0.0
    %1203 = vmatprep.subr.mxu0 0.0
    %1204 = vmatpush1.xpose.msra.mxu0 0.0
    %1205 = vmatprep.subr.mxu0 0.0
    %1206 = vmatpush1.xpose.msra.mxu0 0.0
    %1207 = vmatprep.subr.mxu0 0.0
    %1208 = vmatpush1.xpose.msra.mxu0 0.0
    %1209 = vmatprep.subr.mxu0 0.0
    %1210 = vmatpush1.xpose.msra.mxu0 0.0
    %1211 = vmatprep.subr.mxu0 0.0
    %1212 = vmatpush1.xpose.msra.mxu0 0.0
    %1213 = vmatprep.subr.mxu0 0.0
    %1214 = vmatpush1.xpose.msra.mxu0 0.0
    %1215 = vmatprep.subr.mxu0 0.0
    %1216 = vmatpush1.xpose.msra.mxu0 0.0
    %1217 = vmatprep.subr.mxu0 0.0
    %1218 = vmatpush1.xpose.msra.mxu0 0.0
    %1219 = vmatprep.subr.mxu0 0.0
    %1220 = vmatpush1.xpose.msra.mxu0 0.0
    %1221 = vmatprep.subr.mxu0 0.0
    %1222 = vmatpush1.xpose.msra.mxu0 0.0
    %1223 = vmatprep.subr.mxu0 0.0
    %1224 = vmatpush1.xpose.msra.mxu0 0.0
    %1225 = vmatprep.subr.mxu0 0.0
    %1226 = vmatpush1.xpose.msra.mxu0 0.0
    %1227 = vmatprep.subr.mxu0 0.0
    %1228 = vmatpush1.xpose.msra.mxu0 0.0
    %1229 = vmatprep.subr.mxu0 0.0
    %1230 = vmatpush1.xpose.msra.mxu0 0.0
    %1231 = vmatprep.subr.mxu0 0.0
    %1232 = vmatpush1.xpose.msra.mxu0 0.0
    %1233 = vmatprep.subr.mxu0 0.0
    %1234 = vmatpush1.xpose.msra.mxu0 0.0
    %1235 = vmatprep.subr.mxu0 0.0
    %1236 = vmatpush1.xpose.msra.mxu0 0.0
    %1237 = vmatprep.subr.mxu0 0.0
    %1238 = vmatpush1.xpose.msra.mxu0 0.0
    %1239 = vmatprep.subr.mxu0 0.0
    %1240 = vmatpush1.xpose.msra.mxu0 0.0
    %1241 = vmatprep.subr.mxu0 0.0
    %1242 = vmatpush1.xpose.msra.mxu0 0.0
    %1243 = vmatprep.subr.mxu0 0.0
    %1244 = vmatpush1.xpose.msra.mxu0 0.0
    %1245 = vmatprep.subr.mxu0 0.0
    %1246 = vmatpush1.xpose.msra.mxu0 0.0
    %1247 = vmatprep.subr.mxu0 0.0
    %1248 = vmatpush1.xpose.msra.mxu0 0.0
    %1249 = vmatprep.subr.mxu0 0.0
    %1250 = vmatpush1.xpose.msra.mxu0 0.0
    %1251 = vmatprep.subr.mxu0 0.0
    %1252 = vmatpush1.xpose.msra.mxu0 0.0
    %1253 = vmatprep.subr.mxu0 0.0
    %1254 = vmatpush1.xpose.msra.mxu0 0.0
    %1255 = vmatprep.mubr.f32.mxu0 0.0
    %1256 = vmatmul.mubr.f32.gmra.mrb[0].mxu0 %v1187
    %v1257 = vpop.f32.mrb[0].mxu0
    %v1258 = vadd.f32 0.0, %v1257
    %v1259 = vpop.f32.mrb[0].mxu0
    %1260 = vdwg.mxu0
    %v1261 = vsel %vm180, %v1258, -inf
    %1262 = vmax.xlane.f32.xlu0 %v1261
    %v1263 = vpop.xlane.xlu0 %1262
    %v1264 = vsub.f32 %v1258, %v1263
    %v1265 = vmul.f32 %v1264, 1.442695
    %v1266 = vpow.pop %v1265
    %v1267 = vsel %vm180, %v1266, 0.0
    %1268 = vadd.xlane.f32.xlu0 %v1267
    %v1269 = vpop.xlane.xlu0 %1268
    %v1270 = vrcp.pop %v1269
    %v1271 = vmul.f32 %v1266, %v1270
    %1272 = vrot.lane.b32.xlu0 %v174, 48
    %v1273 = vpop.permute.xlu0 %1272
    %v1276 = vsel %vm180, %v1271, 0
    %1278 = vmatprep.subr.mxu0 0.0
    %1279 = vmatpush1.msra.mxu0 %v1273
    %1280 = vmatprep.subr.mxu0 0.0
    %1281 = vmatpush1.msra.mxu0 0.0
    %1282 = vmatprep.subr.mxu0 0.0
    %1283 = vmatpush1.msra.mxu0 0.0
    %1284 = vmatprep.subr.mxu0 0.0
    %1285 = vmatpush1.msra.mxu0 0.0
    %1286 = vmatprep.subr.mxu0 0.0
    %1287 = vmatpush1.msra.mxu0 0.0
    %1288 = vmatprep.subr.mxu0 0.0
    %1289 = vmatpush1.msra.mxu0 0.0
    %1290 = vmatprep.subr.mxu0 0.0
    %1291 = vmatpush1.msra.mxu0 0.0
    %1292 = vmatprep.subr.mxu0 0.0
    %1293 = vmatpush1.msra.mxu0 0.0
    %1294 = vmatprep.subr.mxu0 0.0
    %1295 = vmatpush1.msra.mxu0 0.0
    %1296 = vmatprep.subr.mxu0 0.0
    %1297 = vmatpush1.msra.mxu0 0.0
    %1298 = vmatprep.subr.mxu0 0.0
    %1299 = vmatpush1.msra.mxu0 0.0
    %1300 = vmatprep.subr.mxu0 0.0
    %1301 = vmatpush1.msra.mxu0 0.0
    %1302 = vmatprep.subr.mxu0 0.0
    %1303 = vmatpush1.msra.mxu0 0.0
    %1304 = vmatprep.subr.mxu0 0.0
    %1305 = vmatpush1.msra.mxu0 0.0
    %1306 = vmatprep.subr.mxu0 0.0
    %1307 = vmatpush1.msra.mxu0 0.0
    %1308 = vmatprep.subr.mxu0 0.0
    %1309 = vmatpush1.msra.mxu0 0.0
    %1310 = vmatprep.subr.mxu0 0.0
    %1311 = vmatpush1.msra.mxu0 0.0
    %1312 = vmatprep.subr.mxu0 0.0
    %1313 = vmatpush1.msra.mxu0 0.0
    %1314 = vmatprep.subr.mxu0 0.0
    %1315 = vmatpush1.msra.mxu0 0.0
    %1316 = vmatprep.subr.mxu0 0.0
    %1317 = vmatpush1.msra.mxu0 0.0
    %1318 = vmatprep.subr.mxu0 0.0
    %1319 = vmatpush1.msra.mxu0 0.0
    %1320 = vmatprep.subr.mxu0 0.0
    %1321 = vmatpush1.msra.mxu0 0.0
    %1322 = vmatprep.subr.mxu0 0.0
    %1323 = vmatpush1.msra.mxu0 0.0
    %1324 = vmatprep.subr.mxu0 0.0
    %1325 = vmatpush1.msra.mxu0 0.0
    %1326 = vmatprep.subr.mxu0 0.0
    %1327 = vmatpush1.msra.mxu0 0.0
    %1328 = vmatprep.subr.mxu0 0.0
    %1329 = vmatpush1.msra.mxu0 0.0
    %1330 = vmatprep.subr.mxu0 0.0
    %1331 = vmatpush1.msra.mxu0 0.0
    %1332 = vmatprep.subr.mxu0 0.0
    %1333 = vmatpush1.msra.mxu0 0.0
    %1334 = vmatprep.subr.mxu0 0.0
    %1335 = vmatpush1.msra.mxu0 0.0
    %1336 = vmatprep.subr.mxu0 0.0
    %1337 = vmatpush1.msra.mxu0 0.0
    %1338 = vmatprep.subr.mxu0 0.0
    %1339 = vmatpush1.msra.mxu0 0.0
    %1340 = vmatprep.subr.mxu0 0.0
    %1341 = vmatpush1.msra.mxu0 0.0
    %1342 = vmatprep.mubr.f32.mxu0 0.0
    %1343 = vmatmul.mubr.f32.gmra.mrb[0].mxu0 %v1276
    %v1344 = vpop.f32.mrb[0].mxu0
    %v1345 = vadd.f32 0.0, %v1344
    %v1346 = vpop.f32.mrb[0].mxu0
    %1347 = vdwg.mxu0
    %1348 = vrot.lane.b32.xlu0 %v174, 104
    %v1349 = vpop.permute.xlu0 %1348
    %1350 = vrot.lane.b32.xlu0 %v174, 72
    %v1351 = vpop.permute.xlu0 %1350
    %v1352 = vsel %vm180, %v1349, 0
    %v1354 = vsel %vm180, %v1351, 0
    %1356 = vmatprep.subr.mxu0 0.0
    %1357 = vmatpush1.xpose.msra.mxu0 %v1354
    %1358 = vmatprep.subr.mxu0 0.0
    %1359 = vmatpush1.xpose.msra.mxu0 0.0
    %1360 = vmatprep.subr.mxu0 0.0
    %1361 = vmatpush1.xpose.msra.mxu0 0.0
    %1362 = vmatprep.subr.mxu0 0.0
    %1363 = vmatpush1.xpose.msra.mxu0 0.0
    %1364 = vmatprep.subr.mxu0 0.0
    %1365 = vmatpush1.xpose.msra.mxu0 0.0
    %1366 = vmatprep.subr.mxu0 0.0
    %1367 = vmatpush1.xpose.msra.mxu0 0.0
    %1368 = vmatprep.subr.mxu0 0.0
    %1369 = vmatpush1.xpose.msra.mxu0 0.0
    %1370 = vmatprep.subr.mxu0 0.0
    %1371 = vmatpush1.xpose.msra.mxu0 0.0
    %1372 = vmatprep.subr.mxu0 0.0
    %1373 = vmatpush1.xpose.msra.mxu0 0.0
    %1374 = vmatprep.subr.mxu0 0.0
    %1375 = vmatpush1.xpose.msra.mxu0 0.0
    %1376 = vmatprep.subr.mxu0 0.0
    %1377 = vmatpush1.xpose.msra.mxu0 0.0
    %1378 = vmatprep.subr.mxu0 0.0
    %1379 = vmatpush1.xpose.msra.mxu0 0.0
    %1380 = vmatprep.subr.mxu0 0.0
    %1381 = vmatpush1.xpose.msra.mxu0 0.0
    %1382 = vmatprep.subr.mxu0 0.0
    %1383 = vmatpush1.xpose.msra.mxu0 0.0
    %1384 = vmatprep.subr.mxu0 0.0
    %1385 = vmatpush1.xpose.msra.mxu0 0.0
    %1386 = vmatprep.subr.mxu0 0.0
    %1387 = vmatpush1.xpose.msra.mxu0 0.0
    %1388 = vmatprep.subr.mxu0 0.0
    %1389 = vmatpush1.xpose.msra.mxu0 0.0
    %1390 = vmatprep.subr.mxu0 0.0
    %1391 = vmatpush1.xpose.msra.mxu0 0.0
    %1392 = vmatprep.subr.mxu0 0.0
    %1393 = vmatpush1.xpose.msra.mxu0 0.0
    %1394 = vmatprep.subr.mxu0 0.0
    %1395 = vmatpush1.xpose.msra.mxu0 0.0
    %1396 = vmatprep.subr.mxu0 0.0
    %1397 = vmatpush1.xpose.msra.mxu0 0.0
    %1398 = vmatprep.subr.mxu0 0.0
    %1399 = vmatpush1.xpose.msra.mxu0 0.0
    %1400 = vmatprep.subr.mxu0 0.0
    %1401 = vmatpush1.xpose.msra.mxu0 0.0
    %1402 = vmatprep.subr.mxu0 0.0
    %1403 = vmatpush1.xpose.msra.mxu0 0.0
    %1404 = vmatprep.subr.mxu0 0.0
    %1405 = vmatpush1.xpose.msra.mxu0 0.0
    %1406 = vmatprep.subr.mxu0 0.0
    %1407 = vmatpush1.xpose.msra.mxu0 0.0
    %1408 = vmatprep.subr.mxu0 0.0
    %1409 = vmatpush1.xpose.msra.mxu0 0.0
    %1410 = vmatprep.subr.mxu0 0.0
    %1411 = vmatpush1.xpose.msra.mxu0 0.0
    %1412 = vmatprep.subr.mxu0 0.0
    %1413 = vmatpush1.xpose.msra.mxu0 0.0
    %1414 = vmatprep.subr.mxu0 0.0
    %1415 = vmatpush1.xpose.msra.mxu0 0.0
    %1416 = vmatprep.subr.mxu0 0.0
    %1417 = vmatpush1.xpose.msra.mxu0 0.0
    %1418 = vmatprep.subr.mxu0 0.0
    %1419 = vmatpush1.xpose.msra.mxu0 0.0
    %1420 = vmatprep.mubr.f32.mxu0 0.0
    %1421 = vmatmul.mubr.f32.gmra.mrb[0].mxu0 %v1352
    %v1422 = vpop.f32.mrb[0].mxu0
    %v1423 = vadd.f32 0.0, %v1422
    %v1424 = vpop.f32.mrb[0].mxu0
    %1425 = vdwg.mxu0
    %v1426 = vsel %vm180, %v1423, -inf
    %1427 = vmax.xlane.f32.xlu0 %v1426
    %v1428 = vpop.xlane.xlu0 %1427
    %v1429 = vsub.f32 %v1423, %v1428
    %v1430 = vmul.f32 %v1429, 1.442695
    %v1431 = vpow.pop %v1430
    %v1432 = vsel %vm180, %v1431, 0.0
    %1433 = vadd.xlane.f32.xlu0 %v1432
    %v1434 = vpop.xlane.xlu0 %1433
    %v1435 = vrcp.pop %v1434
    %v1436 = vmul.f32 %v1431, %v1435
    %1437 = vrot.lane.b32.xlu0 %v174, 40
    %v1438 = vpop.permute.xlu0 %1437
    %v1441 = vsel %vm180, %v1436, 0
    %1443 = vmatprep.subr.mxu0 0.0
    %1444 = vmatpush1.msra.mxu0 %v1438
    %1445 = vmatprep.subr.mxu0 0.0
    %1446 = vmatpush1.msra.mxu0 0.0
    %1447 = vmatprep.subr.mxu0 0.0
    %1448 = vmatpush1.msra.mxu0 0.0
    %1449 = vmatprep.subr.mxu0 0.0
    %1450 = vmatpush1.msra.mxu0 0.0
    %1451 = vmatprep.subr.mxu0 0.0
    %1452 = vmatpush1.msra.mxu0 0.0
    %1453 = vmatprep.subr.mxu0 0.0
    %1454 = vmatpush1.msra.mxu0 0.0
    %1455 = vmatprep.subr.mxu0 0.0
    %1456 = vmatpush1.msra.mxu0 0.0
    %1457 = vmatprep.subr.mxu0 0.0
    %1458 = vmatpush1.msra.mxu0 0.0
    %1459 = vmatprep.subr.mxu0 0.0
    %1460 = vmatpush1.msra.mxu0 0.0
    %1461 = vmatprep.subr.mxu0 0.0
    %1462 = vmatpush1.msra.mxu0 0.0
    %1463 = vmatprep.subr.mxu0 0.0
    %1464 = vmatpush1.msra.mxu0 0.0
    %1465 = vmatprep.subr.mxu0 0.0
    %1466 = vmatpush1.msra.mxu0 0.0
    %1467 = vmatprep.subr.mxu0 0.0
    %1468 = vmatpush1.msra.mxu0 0.0
    %1469 = vmatprep.subr.mxu0 0.0
    %1470 = vmatpush1.msra.mxu0 0.0
    %1471 = vmatprep.subr.mxu0 0.0
    %1472 = vmatpush1.msra.mxu0 0.0
    %1473 = vmatprep.subr.mxu0 0.0
    %1474 = vmatpush1.msra.mxu0 0.0
    %1475 = vmatprep.subr.mxu0 0.0
    %1476 = vmatpush1.msra.mxu0 0.0
    %1477 = vmatprep.subr.mxu0 0.0
    %1478 = vmatpush1.msra.mxu0 0.0
    %1479 = vmatprep.subr.mxu0 0.0
    %1480 = vmatpush1.msra.mxu0 0.0
    %1481 = vmatprep.subr.mxu0 0.0
    %1482 = vmatpush1.msra.mxu0 0.0
    %1483 = vmatprep.subr.mxu0 0.0
    %1484 = vmatpush1.msra.mxu0 0.0
    %1485 = vmatprep.subr.mxu0 0.0
    %1486 = vmatpush1.msra.mxu0 0.0
    %1487 = vmatprep.subr.mxu0 0.0
    %1488 = vmatpush1.msra.mxu0 0.0
    %1489 = vmatprep.subr.mxu0 0.0
    %1490 = vmatpush1.msra.mxu0 0.0
    %1491 = vmatprep.subr.mxu0 0.0
    %1492 = vmatpush1.msra.mxu0 0.0
    %1493 = vmatprep.subr.mxu0 0.0
    %1494 = vmatpush1.msra.mxu0 0.0
    %1495 = vmatprep.subr.mxu0 0.0
    %1496 = vmatpush1.msra.mxu0 0.0
    %1497 = vmatprep.subr.mxu0 0.0
    %1498 = vmatpush1.msra.mxu0 0.0
    %1499 = vmatprep.subr.mxu0 0.0
    %1500 = vmatpush1.msra.mxu0 0.0
    %1501 = vmatprep.subr.mxu0 0.0
    %1502 = vmatpush1.msra.mxu0 0.0
    %1503 = vmatprep.subr.mxu0 0.0
    %1504 = vmatpush1.msra.mxu0 0.0
    %1505 = vmatprep.subr.mxu0 0.0
    %1506 = vmatpush1.msra.mxu0 0.0
    %1507 = vmatprep.mubr.f32.mxu0 0.0
    %1508 = vmatmul.mubr.f32.gmra.mrb[0].mxu0 %v1441
    %v1509 = vpop.f32.mrb[0].mxu0
    %v1510 = vadd.f32 0.0, %v1509
    %v1511 = vpop.f32.mrb[0].mxu0
    %1512 = vdwg.mxu0
    %1514 = vrot.lane.b32.xlu0 %v1180, 8
    %v1515 = vpop.permute.xlu0 %1514
    %1518 = vrot.lane.b32.xlu0 %v1345, 16
    %v1519 = vpop.permute.xlu0 %1518
    %1522 = vrot.lane.b32.xlu0 %v1510, 24
    %v1523 = vpop.permute.xlu0 %1522
    %v1525 = vsel %vm180, %v1015, %v1515
    %v1526 = vsel %vm850, %v1525, %v1519
    %v1527 = vsel %vm852, %v1526, %v1523
    %1532 = vrot.lane.b32.xlu0 %v26, 32
    %v1533 = vpop.permute.xlu0 %1532
    %1534 = vrot.lane.b32.xlu0 %v27, 32
    %v1535 = vpop.permute.xlu0 %1534
    %1536 = vrot.lane.b32.xlu0 %v28, 32
    %v1537 = vpop.permute.xlu0 %1536
    %1538 = vrot.lane.b32.xlu0 %v29, 32
    %v1539 = vpop.permute.xlu0 %1538
    %v1545 = vsel %vm52, %v853, 0
    %v1548 = vsel %vm52, %v1527, 0
    %1550 = vmatprep.subr.mxu0 0.0
    %1551 = vmatpush1.msra.mxu0 %v1533
    %1552 = vmatprep.subr.mxu0 0.0
    %1553 = vmatpush1.msra.mxu0 %v1535
    %1554 = vmatprep.subr.mxu0 0.0
    %1555 = vmatpush1.msra.mxu0 %v1537
    %1556 = vmatprep.subr.mxu0 0.0
    %1557 = vmatpush1.msra.mxu0 %v1539
    %1558 = vmatprep.subr.mxu0 0.0
    %1559 = vmatpush1.msra.mxu0 0.0
    %1560 = vmatprep.subr.mxu0 0.0
    %1561 = vmatpush1.msra.mxu0 0.0
    %1562 = vmatprep.subr.mxu0 0.0
    %1563 = vmatpush1.msra.mxu0 0.0
    %1564 = vmatprep.subr.mxu0 0.0
    %1565 = vmatpush1.msra.mxu0 0.0
    %1566 = vmatprep.subr.mxu0 0.0
    %1567 = vmatpush1.msra.mxu0 0.0
    %1568 = vmatprep.subr.mxu0 0.0
    %1569 = vmatpush1.msra.mxu0 0.0
    %1570 = vmatprep.subr.mxu0 0.0
    %1571 = vmatpush1.msra.mxu0 0.0
    %1572 = vmatprep.subr.mxu0 0.0
    %1573 = vmatpush1.msra.mxu0 0.0
    %1574 = vmatprep.subr.mxu0 0.0
    %1575 = vmatpush1.msra.mxu0 0.0
    %1576 = vmatprep.subr.mxu0 0.0
    %1577 = vmatpush1.msra.mxu0 0.0
    %1578 = vmatprep.subr.mxu0 0.0
    %1579 = vmatpush1.msra.mxu0 0.0
    %1580 = vmatprep.subr.mxu0 0.0
    %1581 = vmatpush1.msra.mxu0 0.0
    %1582 = vmatprep.subr.mxu0 0.0
    %1583 = vmatpush1.msra.mxu0 0.0
    %1584 = vmatprep.subr.mxu0 0.0
    %1585 = vmatpush1.msra.mxu0 0.0
    %1586 = vmatprep.subr.mxu0 0.0
    %1587 = vmatpush1.msra.mxu0 0.0
    %1588 = vmatprep.subr.mxu0 0.0
    %1589 = vmatpush1.msra.mxu0 0.0
    %1590 = vmatprep.subr.mxu0 0.0
    %1591 = vmatpush1.msra.mxu0 0.0
    %1592 = vmatprep.subr.mxu0 0.0
    %1593 = vmatpush1.msra.mxu0 0.0
    %1594 = vmatprep.subr.mxu0 0.0
    %1595 = vmatpush1.msra.mxu0 0.0
    %1596 = vmatprep.subr.mxu0 0.0
    %1597 = vmatpush1.msra.mxu0 0.0
    %1598 = vmatprep.subr.mxu0 0.0
    %1599 = vmatpush1.msra.mxu0 0.0
    %1600 = vmatprep.subr.mxu0 0.0
    %1601 = vmatpush1.msra.mxu0 0.0
    %1602 = vmatprep.subr.mxu0 0.0
    %1603 = vmatpush1.msra.mxu0 0.0
    %1604 = vmatprep.subr.mxu0 0.0
    %1605 = vmatpush1.msra.mxu0 0.0
    %1606 = vmatprep.subr.mxu0 0.0
    %1607 = vmatpush1.msra.mxu0 0.0
    %1608 = vmatprep.subr.mxu0 0.0
    %1609 = vmatpush1.msra.mxu0 0.0
    %1610 = vmatprep.subr.mxu0 0.0
    %1611 = vmatpush1.msra.mxu0 0.0
    %1612 = vmatprep.subr.mxu0 0.0
    %1613 = vmatpush1.msra.mxu0 0.0
    %1614 = vmatprep.mubr.f32.mxu0 0.0
    %1615 = vmatmul.mubr.f32.gmra.mrb[0].mxu0 %v1545
    %v1616 = vpop.f32.mrb[0].mxu0
    %v1617 = vadd.f32 0.0, %v1616
    %v1618 = vpop.f32.mrb[0].mxu0
    %1619 = vmatprep.mubr.f32.mxu0 0.0
    %1620 = vmatmul.mubr.f32.gmra.mrb[0].mxu0 %v1548
    %v1621 = vpop.f32.mrb[0].mxu0
    %v1622 = vadd.f32 0.0, %v1621
    %v1623 = vpop.f32.mrb[0].mxu0
    %1624 = vdwg.mxu0
    %v1625 = vadd.f32 %v50, %v1617
    %v1626 = vadd.f32 %v51, %v1622
    %1628 = vrot.lane.b32.xlu0 %v95, 32
    %v1629 = vpop.permute.xlu0 %1628
    %v1631 = vadd.f32 %v1625, %v1629
    %v1632 = vadd.f32 %v1626, %v1629
    %v1633 = vld [vmem:[%s1] sm:$0x1]
    %v1634 = vlaneseq
    %v1635 = vshrl.u32 %v1634, 7
    %v1636 = vsub.s32 0, %v1635
    %v1637 = vrot.slane %v1633, %v1636
    %v1638 = vld [vmem:[%s1 + $0x1] sm:$0x1]
    %v1639 = vlaneseq
    %v1640 = vshrl.u32 %v1639, 7
    %v1641 = vsub.s32 0, %v1640
    %v1642 = vrot.slane %v1638, %v1641
    %v1643 = vadd.f32 %v1631, %v1637
    %v1644 = vadd.f32 %v1632, %v1642
    %v1645 = vsel %vm52, %v1643, 0.0
    %1646 = vadd.xlane.f32.xlu0 %v1645
    %v1647 = vpop.xlane.xlu0 %1646
    %v1648 = vsel %vm52, %v1644, 0.0
    %1649 = vadd.xlane.f32.xlu0 %v1648
    %v1650 = vpop.xlane.xlu0 %1649
    %v1651 = vmul.f32 %v1647, %v59
    %v1652 = vmul.f32 %v1650, %v59
    %v1653 = vsub.f32 %v1643, %v1651
    %v1654 = vsub.f32 %v1644, %v1652
    %v1655 = vmul.f32 %v1653, %v1653
    %v1656 = vmul.f32 %v1654, %v1654
    %v1657 = vsel %vm52, %v1655, 0.0
    %1658 = vadd.xlane.f32.xlu0 %v1657
    %v1659 = vpop.xlane.xlu0 %1658
    %v1660 = vsel %vm52, %v1656, 0.0
    %1661 = vadd.xlane.f32.xlu0 %v1660
    %v1662 = vpop.xlane.xlu0 %1661
    %v1663 = vmul.f32 %v1659, %v59
    %v1664 = vmul.f32 %v1662, %v59
    %v1665 = vadd.f32 %v1663, 1e-05
    %v1666 = vadd.f32 %v1664, 1e-05
    %v1667 = vrsqrt.pop %v1665
    %v1668 = vrsqrt.pop %v1666
    %v1669 = vmul.f32 %v1653, %v1667
    %v1670 = vmul.f32 %v1654, %v1668
    %v1671 = vlaneseq
    %v1672 = vshrl.u32 %v1671, 7
    %v1673 = vsub.s32 2, %v1672
    %v1674 = vrot.slane %v24, %v1673
    %v1675 = vmul.f32 %v1669, %v1674
    %v1676 = vmul.f32 %v1670, %v1674
    %v1677 = vlaneseq
    %v1678 = vshrl.u32 %v1677, 7
    %v1679 = vsub.s32 3, %v1678
    %v1680 = vrot.slane %v24, %v1679
    %v1681 = vadd.f32 %v1675, %v1680
    %v1682 = vadd.f32 %v1676, %v1680
    %v1683 = vlaneseq
    %v1684 = vshrl.u32 %v1683, 7
    %v1685 = vsub.s32 7, %v1684
    %v1686 = vrot.slane %v24, %v1685
    %v1688 = vsel %vm52, %v1681, 0
    %v1691 = vsel %vm52, %v1682, 0
    %1693 = vmatprep.subr.mxu0 0.0
    %1694 = vmatpush1.msra.mxu0 %v30
    %1695 = vmatprep.subr.mxu0 0.0
    %1696 = vmatpush1.msra.mxu0 %v31
    %1697 = vmatprep.subr.mxu0 0.0
    %1698 = vmatpush1.msra.mxu0 %v32
    %1699 = vmatprep.subr.mxu0 0.0
    %1700 = vmatpush1.msra.mxu0 %v33
    %1701 = vmatprep.subr.mxu0 0.0
    %1702 = vmatpush1.msra.mxu0 0.0
    %1703 = vmatprep.subr.mxu0 0.0
    %1704 = vmatpush1.msra.mxu0 0.0
    %1705 = vmatprep.subr.mxu0 0.0
    %1706 = vmatpush1.msra.mxu0 0.0
    %1707 = vmatprep.subr.mxu0 0.0
    %1708 = vmatpush1.msra.mxu0 0.0
    %1709 = vmatprep.subr.mxu0 0.0
    %1710 = vmatpush1.msra.mxu0 0.0
    %1711 = vmatprep.subr.mxu0 0.0
    %1712 = vmatpush1.msra.mxu0 0.0
    %1713 = vmatprep.subr.mxu0 0.0
    %1714 = vmatpush1.msra.mxu0 0.0
    %1715 = vmatprep.subr.mxu0 0.0
    %1716 = vmatpush1.msra.mxu0 0.0
    %1717 = vmatprep.subr.mxu0 0.0
    %1718 = vmatpush1.msra.mxu0 0.0
    %1719 = vmatprep.subr.mxu0 0.0
    %1720 = vmatpush1.msra.mxu0 0.0
    %1721 = vmatprep.subr.mxu0 0.0
    %1722 = vmatpush1.msra.mxu0 0.0
    %1723 = vmatprep.subr.mxu0 0.0
    %1724 = vmatpush1.msra.mxu0 0.0
    %1725 = vmatprep.subr.mxu0 0.0
    %1726 = vmatpush1.msra.mxu0 0.0
    %1727 = vmatprep.subr.mxu0 0.0
    %1728 = vmatpush1.msra.mxu0 0.0
    %1729 = vmatprep.subr.mxu0 0.0
    %1730 = vmatpush1.msra.mxu0 0.0
    %1731 = vmatprep.subr.mxu0 0.0
    %1732 = vmatpush1.msra.mxu0 0.0
    %1733 = vmatprep.subr.mxu0 0.0
    %1734 = vmatpush1.msra.mxu0 0.0
    %1735 = vmatprep.subr.mxu0 0.0
    %1736 = vmatpush1.msra.mxu0 0.0
    %1737 = vmatprep.subr.mxu0 0.0
    %1738 = vmatpush1.msra.mxu0 0.0
    %1739 = vmatprep.subr.mxu0 0.0
    %1740 = vmatpush1.msra.mxu0 0.0
    %1741 = vmatprep.subr.mxu0 0.0
    %1742 = vmatpush1.msra.mxu0 0.0
    %1743 = vmatprep.subr.mxu0 0.0
    %1744 = vmatpush1.msra.mxu0 0.0
    %1745 = vmatprep.subr.mxu0 0.0
    %1746 = vmatpush1.msra.mxu0 0.0
    %1747 = vmatprep.subr.mxu0 0.0
    %1748 = vmatpush1.msra.mxu0 0.0
    %1749 = vmatprep.subr.mxu0 0.0
    %1750 = vmatpush1.msra.mxu0 0.0
    %1751 = vmatprep.subr.mxu0 0.0
    %1752 = vmatpush1.msra.mxu0 0.0
    %1753 = vmatprep.subr.mxu0 0.0
    %1754 = vmatpush1.msra.mxu0 0.0
    %1755 = vmatprep.subr.mxu0 0.0
    %1756 = vmatpush1.msra.mxu0 0.0
    %1757 = vmatprep.mubr.f32.mxu0 0.0
    %1758 = vmatmul.mubr.f32.gmra.mrb[0].mxu0 %v1688
    %v1759 = vpop.f32.mrb[0].mxu0
    %v1760 = vadd.f32 %v1686, %v1759
    %v1761 = vpop.f32.mrb[0].mxu0
    %1762 = vmatprep.mubr.f32.mxu0 0.0
    %1763 = vmatmul.mubr.f32.gmra.mrb[0].mxu0 %v1691
    %v1764 = vpop.f32.mrb[0].mxu0
    %v1765 = vadd.f32 %v1686, %v1764
    %v1766 = vpop.f32.mrb[0].mxu0
    %1767 = vdwg.mxu0
    %v1768 = vxor.u32 %v1760, 2147483648
    %v1769 = vxor.u32 %v1765, 2147483648
    %v1770 = vmul.f32 %v1768, 1.442695
    %v1771 = vpow.pop %v1770
    %v1772 = vmul.f32 %v1769, 1.442695
    %v1773 = vpow.pop %v1772
    %v1774 = vadd.f32 %v1771, 1.0
    %v1775 = vadd.f32 %v1773, 1.0
    %v1776 = vrcp.pop %v1774
    %v1777 = vmul.f32 1.0, %v1776
    %v1778 = vrcp.pop %v1775
    %v1779 = vmul.f32 1.0, %v1778
    %v1780 = vmul.f32 %v1760, %v1777
    %v1781 = vmul.f32 %v1765, %v1779
    %v1782 = vadd.f32 %v1643, %v1681
    %v1783 = vadd.f32 %v1644, %v1682
    %vm1784 = vcmask 523264
    %v1786 = vsel %vm1784, %v1780, 0
    %v1789 = vsel %vm1784, %v1781, 0
    %1791 = vmatprep.subr.mxu0 0.0
    %1792 = vmatpush1.msra.mxu0 %v34
    %1793 = vmatprep.subr.mxu0 0.0
    %1794 = vmatpush1.msra.mxu0 %v35
    %1795 = vmatprep.subr.mxu0 0.0
    %1796 = vmatpush1.msra.mxu0 %v36
    %1797 = vmatprep.subr.mxu0 0.0
    %1798 = vmatpush1.msra.mxu0 %v37
    %1799 = vmatprep.subr.mxu0 0.0
    %1800 = vmatpush1.msra.mxu0 %v38
    %1801 = vmatprep.subr.mxu0 0.0
    %1802 = vmatpush1.msra.mxu0 %v39
    %1803 = vmatprep.subr.mxu0 0.0
    %1804 = vmatpush1.msra.mxu0 %v40
    %1805 = vmatprep.subr.mxu0 0.0
    %1806 = vmatpush1.msra.mxu0 %v41
    %1807 = vmatprep.subr.mxu0 0.0
    %1808 = vmatpush1.msra.mxu0 0.0
    %1809 = vmatprep.subr.mxu0 0.0
    %1810 = vmatpush1.msra.mxu0 0.0
    %1811 = vmatprep.subr.mxu0 0.0
    %1812 = vmatpush1.msra.mxu0 0.0
    %1813 = vmatprep.subr.mxu0 0.0
    %1814 = vmatpush1.msra.mxu0 0.0
    %1815 = vmatprep.subr.mxu0 0.0
    %1816 = vmatpush1.msra.mxu0 0.0
    %1817 = vmatprep.subr.mxu0 0.0
    %1818 = vmatpush1.msra.mxu0 0.0
    %1819 = vmatprep.subr.mxu0 0.0
    %1820 = vmatpush1.msra.mxu0 0.0
    %1821 = vmatprep.subr.mxu0 0.0
    %1822 = vmatpush1.msra.mxu0 0.0
    %1823 = vmatprep.subr.mxu0 0.0
    %1824 = vmatpush1.msra.mxu0 0.0
    %1825 = vmatprep.subr.mxu0 0.0
    %1826 = vmatpush1.msra.mxu0 0.0
    %1827 = vmatprep.subr.mxu0 0.0
    %1828 = vmatpush1.msra.mxu0 0.0
    %1829 = vmatprep.subr.mxu0 0.0
    %1830 = vmatpush1.msra.mxu0 0.0
    %1831 = vmatprep.subr.mxu0 0.0
    %1832 = vmatpush1.msra.mxu0 0.0
    %1833 = vmatprep.subr.mxu0 0.0
    %1834 = vmatpush1.msra.mxu0 0.0
    %1835 = vmatprep.subr.mxu0 0.0
    %1836 = vmatpush1.msra.mxu0 0.0
    %1837 = vmatprep.subr.mxu0 0.0
    %1838 = vmatpush1.msra.mxu0 0.0
    %1839 = vmatprep.subr.mxu0 0.0
    %1840 = vmatpush1.msra.mxu0 0.0
    %1841 = vmatprep.subr.mxu0 0.0
    %1842 = vmatpush1.msra.mxu0 0.0
    %1843 = vmatprep.subr.mxu0 0.0
    %1844 = vmatpush1.msra.mxu0 0.0
    %1845 = vmatprep.subr.mxu0 0.0
    %1846 = vmatpush1.msra.mxu0 0.0
    %1847 = vmatprep.subr.mxu0 0.0
    %1848 = vmatpush1.msra.mxu0 0.0
    %1849 = vmatprep.subr.mxu0 0.0
    %1850 = vmatpush1.msra.mxu0 0.0
    %1851 = vmatprep.subr.mxu0 0.0
    %1852 = vmatpush1.msra.mxu0 0.0
    %1853 = vmatprep.subr.mxu0 0.0
    %1854 = vmatpush1.msra.mxu0 0.0
    %1855 = vmatprep.mubr.f32.mxu0 0.0
    %1856 = vmatmul.mubr.f32.gmra.mrb[0].mxu0 %v1786
    %v1857 = vpop.f32.mrb[0].mxu0
    %v1858 = vadd.f32 0.0, %v1857
    %v1859 = vpop.f32.mrb[0].mxu0
    %1860 = vmatprep.mubr.f32.mxu0 0.0
    %1861 = vmatmul.mubr.f32.gmra.mrb[0].mxu0 %v1789
    %v1862 = vpop.f32.mrb[0].mxu0
    %v1863 = vadd.f32 0.0, %v1862
    %v1864 = vpop.f32.mrb[0].mxu0
    %1865 = vdwg.mxu0
    %v1866 = vadd.f32 %v1782, %v1858
    %v1867 = vadd.f32 %v1783, %v1863
    %v1868 = vlaneseq
    %v1869 = vshrl.u32 %v1868, 7
    %v1870 = vsub.s32 0, %v1869
    %v1871 = vrot.slane %v25, %v1870
    %v1872 = vadd.f32 %v1866, %v1871
    %v1873 = vadd.f32 %v1867, %v1871
    %v1874 = vsel %vm52, %v1872, 0.0
    %1875 = vadd.xlane.f32.xlu0 %v1874
    %v1876 = vpop.xlane.xlu0 %1875
    %v1877 = vsel %vm52, %v1873, 0.0
    %1878 = vadd.xlane.f32.xlu0 %v1877
    %v1879 = vpop.xlane.xlu0 %1878
    %v1880 = vmul.f32 %v1876, %v59
    %v1881 = vmul.f32 %v1879, %v59
    %v1882 = vsub.f32 %v1872, %v1880
    %v1883 = vsub.f32 %v1873, %v1881
    %v1884 = vmul.f32 %v1882, %v1882
    %v1885 = vmul.f32 %v1883, %v1883
    %v1886 = vsel %vm52, %v1884, 0.0
    %1887 = vadd.xlane.f32.xlu0 %v1886
    %v1888 = vpop.xlane.xlu0 %1887
    %v1889 = vsel %vm52, %v1885, 0.0
    %1890 = vadd.xlane.f32.xlu0 %v1889
    %v1891 = vpop.xlane.xlu0 %1890
    %v1892 = vmul.f32 %v1888, %v59
    %v1893 = vmul.f32 %v1891, %v59
    %v1894 = vadd.f32 %v1892, 1e-05
    %v1895 = vadd.f32 %v1893, 1e-05
    %v1896 = vrsqrt.pop %v1894
    %v1897 = vrsqrt.pop %v1895
    %v1898 = vmul.f32 %v1882, %v1896
    %v1899 = vmul.f32 %v1883, %v1897
    %v1900 = vlaneseq
    %v1901 = vshrl.u32 %v1900, 7
    %v1902 = vsub.s32 4, %v1901
    %v1903 = vrot.slane %v24, %v1902
    %v1904 = vmul.f32 %v1898, %v1903
    %v1905 = vmul.f32 %v1899, %v1903
    %v1906 = vlaneseq
    %v1907 = vshrl.u32 %v1906, 7
    %v1908 = vsub.s32 5, %v1907
    %v1909 = vrot.slane %v24, %v1908
    %v1910 = vadd.f32 %v1904, %v1909
    %v1911 = vadd.f32 %v1905, %v1909
    %1916 = vrot.lane.b32.xlu0 %v30, 64
    %v1917 = vpop.permute.xlu0 %1916
    %1918 = vrot.lane.b32.xlu0 %v31, 64
    %v1919 = vpop.permute.xlu0 %1918
    %1920 = vrot.lane.b32.xlu0 %v32, 64
    %v1921 = vpop.permute.xlu0 %1920
    %1922 = vrot.lane.b32.xlu0 %v33, 64
    %v1923 = vpop.permute.xlu0 %1922
    %1929 = vrot.lane.b32.xlu0 %v1686, 64
    %v1930 = vpop.permute.xlu0 %1929
    %v1933 = vsel %vm52, %v1910, 0
    %v1936 = vsel %vm52, %v1911, 0
    %1938 = vmatprep.subr.mxu0 0.0
    %1939 = vmatpush1.msra.mxu0 %v1917
    %1940 = vmatprep.subr.mxu0 0.0
    %1941 = vmatpush1.msra.mxu0 %v1919
    %1942 = vmatprep.subr.mxu0 0.0
    %1943 = vmatpush1.msra.mxu0 %v1921
    %1944 = vmatprep.subr.mxu0 0.0
    %1945 = vmatpush1.msra.mxu0 %v1923
    %1946 = vmatprep.subr.mxu0 0.0
    %1947 = vmatpush1.msra.mxu0 0.0
    %1948 = vmatprep.subr.mxu0 0.0
    %1949 = vmatpush1.msra.mxu0 0.0
    %1950 = vmatprep.subr.mxu0 0.0
    %1951 = vmatpush1.msra.mxu0 0.0
    %1952 = vmatprep.subr.mxu0 0.0
    %1953 = vmatpush1.msra.mxu0 0.0
    %1954 = vmatprep.subr.mxu0 0.0
    %1955 = vmatpush1.msra.mxu0 0.0
    %1956 = vmatprep.subr.mxu0 0.0
    %1957 = vmatpush1.msra.mxu0 0.0
    %1958 = vmatprep.subr.mxu0 0.0
    %1959 = vmatpush1.msra.mxu0 0.0
    %1960 = vmatprep.subr.mxu0 0.0
    %1961 = vmatpush1.msra.mxu0 0.0
    %1962 = vmatprep.subr.mxu0 0.0
    %1963 = vmatpush1.msra.mxu0 0.0
    %1964 = vmatprep.subr.mxu0 0.0
    %1965 = vmatpush1.msra.mxu0 0.0
    %1966 = vmatprep.subr.mxu0 0.0
    %1967 = vmatpush1.msra.mxu0 0.0
    %1968 = vmatprep.subr.mxu0 0.0
    %1969 = vmatpush1.msra.mxu0 0.0
    %1970 = vmatprep.subr.mxu0 0.0
    %1971 = vmatpush1.msra.mxu0 0.0
    %1972 = vmatprep.subr.mxu0 0.0
    %1973 = vmatpush1.msra.mxu0 0.0
    %1974 = vmatprep.subr.mxu0 0.0
    %1975 = vmatpush1.msra.mxu0 0.0
    %1976 = vmatprep.subr.mxu0 0.0
    %1977 = vmatpush1.msra.mxu0 0.0
    %1978 = vmatprep.subr.mxu0 0.0
    %1979 = vmatpush1.msra.mxu0 0.0
    %1980 = vmatprep.subr.mxu0 0.0
    %1981 = vmatpush1.msra.mxu0 0.0
    %1982 = vmatprep.subr.mxu0 0.0
    %1983 = vmatpush1.msra.mxu0 0.0
    %1984 = vmatprep.subr.mxu0 0.0
    %1985 = vmatpush1.msra.mxu0 0.0
    %1986 = vmatprep.subr.mxu0 0.0
    %1987 = vmatpush1.msra.mxu0 0.0
    %1988 = vmatprep.subr.mxu0 0.0
    %1989 = vmatpush1.msra.mxu0 0.0
    %1990 = vmatprep.subr.mxu0 0.0
    %1991 = vmatpush1.msra.mxu0 0.0
    %1992 = vmatprep.subr.mxu0 0.0
    %1993 = vmatpush1.msra.mxu0 0.0
    %1994 = vmatprep.subr.mxu0 0.0
    %1995 = vmatpush1.msra.mxu0 0.0
    %1996 = vmatprep.subr.mxu0 0.0
    %1997 = vmatpush1.msra.mxu0 0.0
    %1998 = vmatprep.subr.mxu0 0.0
    %1999 = vmatpush1.msra.mxu0 0.0
    %2000 = vmatprep.subr.mxu0 0.0
    %2001 = vmatpush1.msra.mxu0 0.0
    %2002 = vmatprep.mubr.f32.mxu0 0.0
    %2003 = vmatmul.mubr.f32.gmra.mrb[0].mxu0 %v1933
    %v2004 = vpop.f32.mrb[0].mxu0
    %v2005 = vadd.f32 %v1930, %v2004
    %v2006 = vpop.f32.mrb[0].mxu0
    %2007 = vmatprep.mubr.f32.mxu0 0.0
    %2008 = vmatmul.mubr.f32.gmra.mrb[0].mxu0 %v1936
    %v2009 = vpop.f32.mrb[0].mxu0
    %v2010 = vadd.f32 %v1930, %v2009
    %v2011 = vpop.f32.mrb[0].mxu0
    %2012 = vdwg.mxu0
    %v2013 = vxor.u32 %v2005, 2147483648
    %v2014 = vxor.u32 %v2010, 2147483648
    %v2015 = vmul.f32 %v2013, 1.442695
    %v2016 = vpow.pop %v2015
    %v2017 = vmul.f32 %v2014, 1.442695
    %v2018 = vpow.pop %v2017
    %v2019 = vadd.f32 %v2016, 1.0
    %v2020 = vadd.f32 %v2018, 1.0
    %v2021 = vrcp.pop %v2019
    %v2022 = vmul.f32 1.0, %v2021
    %v2023 = vrcp.pop %v2020
    %v2024 = vmul.f32 1.0, %v2023
    %v2025 = vmul.f32 %v2005, %v2022
    %v2026 = vmul.f32 %v2010, %v2024
    %v2028 = vsel %vm1784, %v2025, 0
    %v2031 = vsel %vm1784, %v2026, 0
    %2033 = vmatprep.subr.mxu0 0.0
    %2034 = vmatpush1.msra.mxu0 %v42
    %2035 = vmatprep.subr.mxu0 0.0
    %2036 = vmatpush1.msra.mxu0 %v43
    %2037 = vmatprep.subr.mxu0 0.0
    %2038 = vmatpush1.msra.mxu0 %v44
    %2039 = vmatprep.subr.mxu0 0.0
    %2040 = vmatpush1.msra.mxu0 %v45
    %2041 = vmatprep.subr.mxu0 0.0
    %2042 = vmatpush1.msra.mxu0 %v46
    %2043 = vmatprep.subr.mxu0 0.0
    %2044 = vmatpush1.msra.mxu0 %v47
    %2045 = vmatprep.subr.mxu0 0.0
    %2046 = vmatpush1.msra.mxu0 %v48
    %2047 = vmatprep.subr.mxu0 0.0
    %2048 = vmatpush1.msra.mxu0 %v49
    %2049 = vmatprep.subr.mxu0 0.0
    %2050 = vmatpush1.msra.mxu0 0.0
    %2051 = vmatprep.subr.mxu0 0.0
    %2052 = vmatpush1.msra.mxu0 0.0
    %2053 = vmatprep.subr.mxu0 0.0
    %2054 = vmatpush1.msra.mxu0 0.0
    %2055 = vmatprep.subr.mxu0 0.0
    %2056 = vmatpush1.msra.mxu0 0.0
    %2057 = vmatprep.subr.mxu0 0.0
    %2058 = vmatpush1.msra.mxu0 0.0
    %2059 = vmatprep.subr.mxu0 0.0
    %2060 = vmatpush1.msra.mxu0 0.0
    %2061 = vmatprep.subr.mxu0 0.0
    %2062 = vmatpush1.msra.mxu0 0.0
    %2063 = vmatprep.subr.mxu0 0.0
    %2064 = vmatpush1.msra.mxu0 0.0
    %2065 = vmatprep.subr.mxu0 0.0
    %2066 = vmatpush1.msra.mxu0 0.0
    %2067 = vmatprep.subr.mxu0 0.0
    %2068 = vmatpush1.msra.mxu0 0.0
    %2069 = vmatprep.subr.mxu0 0.0
    %2070 = vmatpush1.msra.mxu0 0.0
    %2071 = vmatprep.subr.mxu0 0.0
    %2072 = vmatpush1.msra.mxu0 0.0
    %2073 = vmatprep.subr.mxu0 0.0
    %2074 = vmatpush1.msra.mxu0 0.0
    %2075 = vmatprep.subr.mxu0 0.0
    %2076 = vmatpush1.msra.mxu0 0.0
    %2077 = vmatprep.subr.mxu0 0.0
    %2078 = vmatpush1.msra.mxu0 0.0
    %2079 = vmatprep.subr.mxu0 0.0
    %2080 = vmatpush1.msra.mxu0 0.0
    %2081 = vmatprep.subr.mxu0 0.0
    %2082 = vmatpush1.msra.mxu0 0.0
    %2083 = vmatprep.subr.mxu0 0.0
    %2084 = vmatpush1.msra.mxu0 0.0
    %2085 = vmatprep.subr.mxu0 0.0
    %2086 = vmatpush1.msra.mxu0 0.0
    %2087 = vmatprep.subr.mxu0 0.0
    %2088 = vmatpush1.msra.mxu0 0.0
    %2089 = vmatprep.subr.mxu0 0.0
    %2090 = vmatpush1.msra.mxu0 0.0
    %2091 = vmatprep.subr.mxu0 0.0
    %2092 = vmatpush1.msra.mxu0 0.0
    %2093 = vmatprep.subr.mxu0 0.0
    %2094 = vmatpush1.msra.mxu0 0.0
    %2095 = vmatprep.subr.mxu0 0.0
    %2096 = vmatpush1.msra.mxu0 0.0
    %2097 = vmatprep.mubr.f32.mxu0 0.0
    %2098 = vmatmul.mubr.f32.gmra.mrb[0].mxu0 %v2028
    %v2099 = vpop.f32.mrb[0].mxu0
    %v2100 = vadd.f32 0.0, %v2099
    %v2101 = vpop.f32.mrb[0].mxu0
    %2102 = vmatprep.mubr.f32.mxu0 0.0
    %2103 = vmatmul.mubr.f32.gmra.mrb[0].mxu0 %v2031
    %v2104 = vpop.f32.mrb[0].mxu0
    %v2105 = vadd.f32 0.0, %v2104
    %v2106 = vpop.f32.mrb[0].mxu0
    %2107 = vdwg.mxu0
    %v2108 = vadd.f32 %v1872, %v2100
    %v2109 = vadd.f32 %v1873, %v2105
    %2111 = vrot.lane.b32.xlu0 %v1871, 96
    %v2112 = vpop.permute.xlu0 %2111
    %v2114 = vadd.f32 %v2108, %v2112
    %v2115 = vadd.f32 %v2109, %v2112
    %2116 = vst.msk [vmem:[#allocation2] sm:$0xff] %vm52, %v2114
    %2117 = vst.msk [vmem:[#allocation2 + $0x8] sm:$0xff] %vm52, %v2115
    // Predicated region
    $region26: #{tpu_custom_call.1} parent=1 // pred_check
      _
    $region27: #{tpu_custom_call.1} parent=1 // pred_check_branch
      %2119 = sbr.rel (0) target = $region29
    $region28: #{tpu_custom_call.1} parent=1 // pred_region
      %s2121 = ssub.s32 256, 256
      %2122 = vsyncadd [#allocation3], %s2121
      %s2123 = sshll.u32 [#allocation2], 4
      %s2124 = int_to_ptr.vmem [resolvable:$true] %s2123
      %2129 = dma.vmem_to_hbm [thread:$0]  %s2124, 256, %s6, [#allocation3], 128, 128, 8
    $region29: #{tpu_custom_call.1} parent=1 // pred_fallthru
      _
    // Predicated region
    $region30: #{tpu_custom_call.1} parent=1 // pred_check
      _
    $region31: #{tpu_custom_call.1} parent=1 // pred_check_branch
      %2131 = sbr.rel (0) target = $region33
    $region32: #{tpu_custom_call.1} parent=1 // pred_region
      %2132 = dma.done [#allocation3], 256
    $region33: #{tpu_custom_call.1} parent=1 // pred_fallthru
      _
    %2133 = vsyncpa [#allocation3], 1

</llo_original>
